<compile_context>
chip_gen: v5e
topology: v5e:2x2
jax: 0.10.0
libtpu: 0.0.40
codegen_flags: <defaults>
</compile_context>

<pallas_src>
import functools
import math

import jax
import jax.numpy as jnp
from jax import lax
from jax.experimental import pallas as pl
from jax.experimental.pallas import tpu as pltpu


# ----------------------------------------------------------------------------
# Pallas kernel: whole transformer block for one batch-tile per grid step.
# ----------------------------------------------------------------------------
def _transformer_block_kernel(
    x_ref,                                   # (Bt, S, E) f32
    ln0_g_ref, ln0_b_ref,                    # (1, E) f32
    wqkv_ref, bqkv_ref,                      # (E, 3E) bf16, (1, 3E) f32
    wo_ref, bo_ref,                          # (E, E) bf16, (1, E) f32
    ln1_g_ref, ln1_b_ref,                    # (1, E) f32
    w1_ref, b1_ref,                          # (E, F) bf16, (1, F) f32
    w2_ref, b2_ref,                          # (F, E) bf16, (1, E) f32
    ln2_g_ref, ln2_b_ref,                    # (1, E) f32
    o_ref,                                   # (Bt, S, E) out dtype
    ctx_ref,                                 # (Bt*S, E) bf16 VMEM scratch
    *, num_heads: int, eps: float,
):
    Bt, S, E = x_ref.shape
    M = Bt * S
    D = E // num_heads
    bf16 = jnp.bfloat16

    # Flatten batch into the matmul M dimension (leading-dim collapse only;
    # the minor dim is untouched -> no relayout).
    x = x_ref[...].reshape(M, E)

    def layer_norm(v, g, b):
        mu = jnp.mean(v, axis=-1, keepdims=True)
        d = v - mu
        var = jnp.mean(d * d, axis=-1, keepdims=True)
        return d * lax.rsqrt(var + eps) * g + b

    # --- pre-attention LayerNorm (f32) -------------------------------------
    ln_in = layer_norm(x, ln0_g_ref[0], ln0_b_ref[0])

    # --- fused QKV projection: one (M,E)@(E,3E) bf16 matmul, f32 accum ------
    # Cast to bf16 right after the bias add so no f32 (M,3E) stays live
    # through the attention phase.  The 1/sqrt(D) scale is already folded
    # into the q columns / bias in the wrapper.
    qkv = (jnp.dot(ln_in.astype(bf16), wqkv_ref[...],
                   preferred_element_type=jnp.float32)
           + bqkv_ref[0]).astype(bf16)                           # (M, 3E)

    # --- multi-head self-attention ------------------------------------------
    # Static head loop; each head writes its context into the shared bf16
    # scratch, then ONE (M,E)@(E,E) output projection after the loop (review
    # item #1: avoids H tiny K=D matmuls at ~25% MXU depth utilization).
    # TODO(synk): on v6e/v7x, batch 2-4 heads per dot_general to amortize MXU
    # push/pop further (K=D per-head is inherent to attention).
    for h in range(num_heads):               # static, num_heads is small
        q_h = qkv[:, 0 * E + h * D: 0 * E + (h + 1) * D].reshape(Bt, S, D)
        k_h = qkv[:, 1 * E + h * D: 1 * E + (h + 1) * D].reshape(Bt, S, D)
        v_h = qkv[:, 2 * E + h * D: 2 * E + (h + 1) * D].reshape(Bt, S, D)
        # Scores: contract head_dim of q and k directly (no transpose).
        s = lax.dot_general(q_h, k_h,
                            (((2,), (2,)), ((0,), (0,))),
                            preferred_element_type=jnp.float32)   # (Bt,S,S)
        s = s - jnp.max(s, axis=-1, keepdims=True)
        p = jnp.exp(s)
        p = p * pl.reciprocal(jnp.sum(p, axis=-1, keepdims=True), approx=True)
        ctx = lax.dot_general(p.astype(bf16), v_h,
                              (((2,), (1,)), ((0,), (0,))),
                              preferred_element_type=jnp.float32)  # (Bt,S,D)
        ctx_ref[:, h * D:(h + 1) * D] = ctx.reshape(M, D).astype(bf16)

    # One K=E output projection over all heads at once.
    attn = jnp.dot(ctx_ref[...], wo_ref[...],
                   preferred_element_type=jnp.float32) + bo_ref[0]
    # dropout_1: identity in eval mode.

    # --- residual + LayerNorm 1 (f32) ---------------------------------------
    out1 = layer_norm(x + attn, ln1_g_ref[0], ln1_b_ref[0])

    # --- FFN: Linear -> GELU (exact, f32) -> Linear --------------------------
    # TODO(synk): at real ViT sizes (E>=768, F>=3072) tile the FFN over F
    # (extra "arbitrary" grid axis + VMEM accumulator) and the M=Bt*S rows so
    # the f32 (M,F) activation + weights fit v7x's 64 MiB VMEM.
    h1 = jnp.dot(out1.astype(bf16), w1_ref[...],
                 preferred_element_type=jnp.float32) + b1_ref[0]
    h1 = 0.5 * h1 * (1.0 + lax.erf(h1 * (1.0 / math.sqrt(2.0))))   # nn.GELU
    ffn = jnp.dot(h1.astype(bf16), w2_ref[...],
                  preferred_element_type=jnp.float32) + b2_ref[0]
    # ffn dropout: identity in eval mode.

    # --- residual + LayerNorm 2 (f32) ---------------------------------------
    out = layer_norm(out1 + ffn, ln2_g_ref[0], ln2_b_ref[0])
    o_ref[...] = out.reshape(Bt, S, E).astype(o_ref.dtype)


# ----------------------------------------------------------------------------
# Wrapper: parameter plumbing (bf16 weights, fused+scaled QKV) + pallas_call
# ----------------------------------------------------------------------------
def transformer_block(x, params, *, num_heads: int, eps: float = 1e-6,
                      batch_tile: int | None = None, out_dtype=None):
    B, S, E = x.shape
    F = params["w1"].shape[0]
    D = E // num_heads
    scale = 1.0 / math.sqrt(D)
    out_dtype = x.dtype if out_dtype is None else out_dtype

    # Batch tile: keep the grid at >= 2-4 steps so software pipelining has
    # something to overlap and v7x's second TensorCore gets sharded work
    # (review item: grid=1 disables both).
    if batch_tile is None:
        Bt = max(1, B // 4)
        while B % Bt:            # largest divisor of B not exceeding B//4 (>=1)
            Bt -= 1
    else:
        Bt = batch_tile
    assert B % Bt == 0, "batch_tile must divide batch size"

    bf16 = jnp.bfloat16
    row = lambda v: v.reshape(1, -1)

    # Fused QKV weight (in x out layout) with the attention scale folded into
    # the q columns / bias; weights cast to bf16 once here (f32 accumulation
    # happens in-kernel via preferred_element_type).
    wqkv = jnp.concatenate(
        [params["wq"].T * scale, params["wk"].T, params["wv"].T],
        axis=1).astype(bf16)                                     # (E, 3E)
    bqkv = jnp.concatenate(
        [params["bq"] * scale, params["bk"], params["bv"]]).reshape(1, -1)

    args = (
        x,
        row(params["ln0_g"]), row(params["ln0_b"]),
        wqkv, bqkv,
        params["wo"].T.astype(bf16), row(params["bo"]),
        row(params["ln1_g"]), row(params["ln1_b"]),
        params["w1"].T.astype(bf16), row(params["b1"]),
        params["w2"].T.astype(bf16), row(params["b2"]),
        row(params["ln2_g"]), row(params["ln2_b"]),
    )

    def full_spec(a):
        # Whole (small) parameter array resident for every grid step
        # (constant index_map).
        # TODO(synk): at real ViT sizes, single-buffer these constant weight
        # specs (pipeline_mode=pl.Buffered(1)) and tile w1/w2 over F so the
        # weight set fits v7x's 64 MiB VMEM.
        return pl.BlockSpec(a.shape, lambda b: (0,) * a.ndim)

    in_specs = [pl.BlockSpec((Bt, S, E), lambda b: (b, 0, 0))] + [
        full_spec(a) for a in args[1:]
    ]

    kernel = functools.partial(_transformer_block_kernel,
                               num_heads=num_heads, eps=eps)

    # Advisory cost estimate so XLA schedules surrounding ops sensibly when
    # the block is stacked N times.
    flops = 2 * B * S * (3 * E * E + 2 * S * E + E * E + 2 * E * F)
    transcendentals = B * S * (num_heads * S + F)
    bytes_accessed = (2 * B * S * E * 4                    # x in + out
                      + (4 * E * E + 2 * E * F) * 2        # bf16 weights
                      + (3 * E + 2 * E + F + 6 * E) * 4)   # biases + LN params
    cost = pl.CostEstimate(flops=flops, transcendentals=transcendentals,
                           bytes_accessed=bytes_accessed)

    return pl.pallas_call(
        kernel,
        out_shape=jax.ShapeDtypeStruct((B, S, E), out_dtype),
        grid=(B // Bt,),
        in_specs=in_specs,
        out_specs=pl.BlockSpec((Bt, S, E), lambda b: (b, 0, 0)),
        scratch_shapes=[pltpu.VMEM((Bt * S, E), bf16)],   # per-head ctx slab
        compiler_params=pltpu.CompilerParams(
            dimension_semantics=("parallel",),
            vmem_limit_bytes=32 * 1024 * 1024),
        cost_estimate=cost,
    )(*args)


# ----------------------------------------------------------------------------
# Pure-JAX f32 reference (same math as the PyTorch module) for a sanity check.
# ----------------------------------------------------------------------------
def transformer_block_ref(x, p, *, num_heads: int, eps: float = 1e-6):
    def ln(v, g, b):
        mu = v.mean(-1, keepdims=True)
        var = ((v - mu) ** 2).mean(-1, keepdims=True)
        return (v - mu) / jnp.sqrt(var + eps) * g + b

    hp = jax.lax.Precision.HIGHEST
    B, S, E = x.shape
    D = E // num_heads
    ln_in = ln(x, p["ln0_g"], p["ln0_b"])
    q = jnp.einsum("bse,oe->bso", ln_in, p["wq"], precision=hp) + p["bq"]
    k = jnp.einsum("bse,oe->bso", ln_in, p["wk"], precision=hp) + p["bk"]
    v = jnp.einsum("bse,oe->bso", ln_in, p["wv"], precision=hp) + p["bv"]
    q = q.reshape(B, S, num_heads, D) / math.sqrt(D)
    k = k.reshape(B, S, num_heads, D)
    v = v.reshape(B, S, num_heads, D)
    s = jnp.einsum("bqhd,bkhd->bhqk", q, k, precision=hp)
    pr = jax.nn.softmax(s, axis=-1)
    a = jnp.einsum("bhqk,bkhd->bqhd", pr, v, precision=hp).reshape(B, S, E)
    attn = jnp.einsum("bse,oe->bso", a, p["wo"], precision=hp) + p["bo"]
    out1 = ln(x + attn, p["ln1_g"], p["ln1_b"])
    h1 = jnp.einsum("bse,fe->bsf", out1, p["w1"], precision=hp) + p["b1"]
    h1 = 0.5 * h1 * (1.0 + jax.lax.erf(h1 / math.sqrt(2.0)))
    ffn = jnp.einsum("bsf,ef->bse", h1, p["w2"], precision=hp) + p["b2"]
    return ln(out1 + ffn, p["ln2_g"], p["ln2_b"])


# ----------------------------------------------------------------------------
# Deterministic parameter construction (PyTorch-layout shapes).
# ----------------------------------------------------------------------------
def make_params(key, embed_dim, ff_dim):
    ks = jax.random.split(key, 16)
    g = lambda k, shape, s=0.05: (s * jax.random.normal(k, shape)).astype(jnp.float32)
    E, F = embed_dim, ff_dim
    return {
        "ln0_g": jnp.ones((E,), jnp.float32), "ln0_b": jnp.zeros((E,), jnp.float32),
        "wq": g(ks[0], (E, E)), "wk": g(ks[1], (E, E)), "wv": g(ks[2], (E, E)),
        "bq": g(ks[3], (E,)),  "bk": g(ks[4], (E,)),  "bv": g(ks[5], (E,)),
        "wo": g(ks[6], (E, E)), "bo": g(ks[7], (E,)),
        "ln1_g": jnp.ones((E,), jnp.float32), "ln1_b": jnp.zeros((E,), jnp.float32),
        "w1": g(ks[8], (F, E)), "b1": g(ks[9], (F,)),
        "w2": g(ks[10], (E, F)), "b2": g(ks[11], (E,)),
        "ln2_g": jnp.ones((E,), jnp.float32), "ln2_b": jnp.zeros((E,), jnp.float32),
    }


if __name__ == "__main__":
    # Small shapes consistent with the module: batch=2, seq=8, embed=32,
    # heads=4 (head_dim=8), ff_dim=64, key_dim == embed_dim.
    B, S, E, H, F = 2, 8, 32, 4, 64

    key = jax.random.PRNGKey(0)
    kx, kp = jax.random.split(key)
    x = jax.random.normal(kx, (B, S, E), dtype=jnp.float32)
    params = make_params(kp, E, F)

    out = transformer_block(x, params, num_heads=H)
    out = jax.block_until_ready(out)

    ref = jax.block_until_ready(transformer_block_ref(x, params, num_heads=H))
    assert out.shape == (B, S, E)
    assert jnp.allclose(out, ref, atol=2e-2, rtol=2e-2), (
        "kernel/reference mismatch: max abs diff "
        f"{float(jnp.max(jnp.abs(out - ref)))}")

    print("KERNEL_OK")
</pallas_src>

<mosaic_0001>
module attributes {stable_mosaic.version = 11 : i64} {
  func.func @_transformer_block_kernel(%arg0: i32, %arg1: memref<1x8x32xf32, #tpu.memory_space<vmem>>, %arg2: memref<1x32xf32, #tpu.memory_space<vmem>>, %arg3: memref<1x32xf32, #tpu.memory_space<vmem>>, %arg4: memref<32x96xbf16, #tpu.memory_space<vmem>>, %arg5: memref<1x96xf32, #tpu.memory_space<vmem>>, %arg6: memref<32x32xbf16, #tpu.memory_space<vmem>>, %arg7: memref<1x32xf32, #tpu.memory_space<vmem>>, %arg8: memref<1x32xf32, #tpu.memory_space<vmem>>, %arg9: memref<1x32xf32, #tpu.memory_space<vmem>>, %arg10: memref<32x64xbf16, #tpu.memory_space<vmem>>, %arg11: memref<1x64xf32, #tpu.memory_space<vmem>>, %arg12: memref<64x32xbf16, #tpu.memory_space<vmem>>, %arg13: memref<1x32xf32, #tpu.memory_space<vmem>>, %arg14: memref<1x32xf32, #tpu.memory_space<vmem>>, %arg15: memref<1x32xf32, #tpu.memory_space<vmem>>, %arg16: memref<1x8x32xf32, #tpu.memory_space<vmem>>, %arg17: memref<8x32xbf16, #tpu.memory_space<vmem>>) attributes {dimension_semantics = [#tpu.dimension_semantics<parallel>], iteration_bounds = array<i64: 2>, scalar_prefetch = 0 : i64, scratch_operands = 1 : i64, tpu.core_type = #tpu.core_type<tc>, window_params = [{transform_indices = @transform_0, window_bounds = array<i64: 1, 8, 32>}, {pipeline_mode = #tpu.pipeline_mode<synchronous>, transform_indices = @transform_1, window_bounds = array<i64: 1, 32>}, {pipeline_mode = #tpu.pipeline_mode<synchronous>, transform_indices = @transform_2, window_bounds = array<i64: 1, 32>}, {pipeline_mode = #tpu.pipeline_mode<synchronous>, transform_indices = @transform_3, window_bounds = array<i64: 32, 96>}, {pipeline_mode = #tpu.pipeline_mode<synchronous>, transform_indices = @transform_4, window_bounds = array<i64: 1, 96>}, {pipeline_mode = #tpu.pipeline_mode<synchronous>, transform_indices = @transform_5, window_bounds = array<i64: 32, 32>}, {pipeline_mode = #tpu.pipeline_mode<synchronous>, transform_indices = @transform_6, window_bounds = array<i64: 1, 32>}, {pipeline_mode = #tpu.pipeline_mode<synchronous>, transform_indices = @transform_7, window_bounds = array<i64: 1, 32>}, {pipeline_mode = #tpu.pipeline_mode<synchronous>, transform_indices = @transform_8, window_bounds = array<i64: 1, 32>}, {pipeline_mode = #tpu.pipeline_mode<synchronous>, transform_indices = @transform_9, window_bounds = array<i64: 32, 64>}, {pipeline_mode = #tpu.pipeline_mode<synchronous>, transform_indices = @transform_10, window_bounds = array<i64: 1, 64>}, {pipeline_mode = #tpu.pipeline_mode<synchronous>, transform_indices = @transform_11, window_bounds = array<i64: 64, 32>}, {pipeline_mode = #tpu.pipeline_mode<synchronous>, transform_indices = @transform_12, window_bounds = array<i64: 1, 32>}, {pipeline_mode = #tpu.pipeline_mode<synchronous>, transform_indices = @transform_13, window_bounds = array<i64: 1, 32>}, {pipeline_mode = #tpu.pipeline_mode<synchronous>, transform_indices = @transform_14, window_bounds = array<i64: 1, 32>}, {transform_indices = @transform_15, window_bounds = array<i64: 1, 8, 32>}]} {
    %c0 = arith.constant 0 : index
    %c0_0 = arith.constant 0 : index
    %c0_1 = arith.constant 0 : index
    %0 = vector.load %arg1[%c0, %c0_0, %c0_1] : memref<1x8x32xf32, #tpu.memory_space<vmem>>, vector<1x8x32xf32>
    %1 = vector.shape_cast %0 : vector<1x8x32xf32> to vector<8x32xf32>
    %c0_2 = arith.constant 0 : index
    %c0_3 = arith.constant 0 : index
    %2 = vector.load %arg2[%c0_2, %c0_3] : memref<1x32xf32, #tpu.memory_space<vmem>>, vector<1x32xf32>
    %3 = vector.shape_cast %2 : vector<1x32xf32> to vector<32xf32>
    %c0_4 = arith.constant 0 : index
    %c0_5 = arith.constant 0 : index
    %4 = vector.load %arg3[%c0_4, %c0_5] : memref<1x32xf32, #tpu.memory_space<vmem>>, vector<1x32xf32>
    %5 = vector.shape_cast %4 : vector<1x32xf32> to vector<32xf32>
    %cst = arith.constant dense<0.000000e+00> : vector<8xf32>
    %6 = vector.multi_reduction <add>, %1, %cst [1] : vector<8x32xf32> to vector<8xf32>
    %7 = vector.shape_cast %6 : vector<8xf32> to vector<8x1xf32>
    %cst_6 = arith.constant 3.200000e+01 : f32
    %8 = vector.broadcast %cst_6 : f32 to vector<8x1xf32>
    %9 = arith.divf %7, %8 : vector<8x1xf32>
    %10 = vector.broadcast %9 : vector<8x1xf32> to vector<8x32xf32>
    %11 = arith.subf %1, %10 : vector<8x32xf32>
    %12 = arith.mulf %11, %11 : vector<8x32xf32>
    %cst_7 = arith.constant dense<0.000000e+00> : vector<8xf32>
    %13 = vector.multi_reduction <add>, %12, %cst_7 [1] : vector<8x32xf32> to vector<8xf32>
    %14 = vector.shape_cast %13 : vector<8xf32> to vector<8x1xf32>
    %cst_8 = arith.constant 3.200000e+01 : f32
    %15 = vector.broadcast %cst_8 : f32 to vector<8x1xf32>
    %16 = arith.divf %14, %15 : vector<8x1xf32>
    %cst_9 = arith.constant 9.99999997E-7 : f32
    %17 = vector.broadcast %cst_9 : f32 to vector<8x1xf32>
    %18 = arith.addf %16, %17 : vector<8x1xf32>
    %19 = math.rsqrt %18 : vector<8x1xf32>
    %20 = vector.broadcast %19 : vector<8x1xf32> to vector<8x32xf32>
    %21 = arith.mulf %11, %20 : vector<8x32xf32>
    %22 = vector.shape_cast %3 : vector<32xf32> to vector<1x32xf32>
    %23 = vector.broadcast %22 : vector<1x32xf32> to vector<8x32xf32>
    %24 = arith.mulf %21, %23 : vector<8x32xf32>
    %25 = vector.shape_cast %5 : vector<32xf32> to vector<1x32xf32>
    %26 = vector.broadcast %25 : vector<1x32xf32> to vector<8x32xf32>
    %27 = arith.addf %24, %26 : vector<8x32xf32>
    %28 = arith.truncf %27 : vector<8x32xf32> to vector<8x32xbf16>
    %c0_10 = arith.constant 0 : index
    %c0_11 = arith.constant 0 : index
    %29 = vector.load %arg4[%c0_10, %c0_11] : memref<32x96xbf16, #tpu.memory_space<vmem>>, vector<32x96xbf16>
    %cst_12 = arith.constant dense<0.000000e+00> : vector<8x96xf32>
    %30 = tpu.matmul %28, %29, %cst_12 {dimension_numbers = #tpu.dot_dimension_numbers<[1], [0], [0], [1], [0, 0, 1, 1], [], []>} : vector<8x32xbf16>, vector<32x96xbf16>, vector<8x96xf32> -> vector<8x96xf32>
    %c0_13 = arith.constant 0 : index
    %c0_14 = arith.constant 0 : index
    %31 = vector.load %arg5[%c0_13, %c0_14] : memref<1x96xf32, #tpu.memory_space<vmem>>, vector<1x96xf32>
    %32 = vector.shape_cast %31 : vector<1x96xf32> to vector<96xf32>
    %33 = vector.shape_cast %32 : vector<96xf32> to vector<1x96xf32>
    %34 = vector.broadcast %33 : vector<1x96xf32> to vector<8x96xf32>
    %35 = arith.addf %30, %34 : vector<8x96xf32>
    %36 = arith.truncf %35 : vector<8x96xf32> to vector<8x96xbf16>
    %37 = vector.extract_strided_slice %36 {offsets = [0, 0], sizes = [8, 8], strides = [1, 1]} : vector<8x96xbf16> to vector<8x8xbf16>
    %38 = vector.shape_cast %37 : vector<8x8xbf16> to vector<1x8x8xbf16>
    %39 = vector.extract_strided_slice %36 {offsets = [0, 32], sizes = [8, 8], strides = [1, 1]} : vector<8x96xbf16> to vector<8x8xbf16>
    %40 = vector.shape_cast %39 : vector<8x8xbf16> to vector<1x8x8xbf16>
    %41 = vector.extract_strided_slice %36 {offsets = [0, 64], sizes = [8, 8], strides = [1, 1]} : vector<8x96xbf16> to vector<8x8xbf16>
    %42 = vector.shape_cast %41 : vector<8x8xbf16> to vector<1x8x8xbf16>
    %cst_15 = arith.constant dense<0.000000e+00> : vector<1x8x8xf32>
    %43 = tpu.matmul %38, %40, %cst_15 {dimension_numbers = #tpu.dot_dimension_numbers<[2], [2], [1], [1], [0, 0, 0, 1, 1, 1], [0], [0]>} : vector<1x8x8xbf16>, vector<1x8x8xbf16>, vector<1x8x8xf32> -> vector<1x8x8xf32>
    %cst_16 = arith.constant dense<0xFF800000> : vector<1x8xf32>
    %44 = vector.multi_reduction <maximumf>, %43, %cst_16 [2] : vector<1x8x8xf32> to vector<1x8xf32>
    %45 = vector.shape_cast %44 : vector<1x8xf32> to vector<1x8x1xf32>
    %46 = vector.broadcast %45 : vector<1x8x1xf32> to vector<1x8x8xf32>
    %47 = arith.subf %43, %46 : vector<1x8x8xf32>
    %48 = math.exp %47 : vector<1x8x8xf32>
    %cst_17 = arith.constant dense<0.000000e+00> : vector<1x8xf32>
    %49 = vector.multi_reduction <add>, %48, %cst_17 [2] : vector<1x8x8xf32> to vector<1x8xf32>
    %50 = vector.shape_cast %49 : vector<1x8xf32> to vector<1x8x1xf32>
    %51 = tpu.reciprocal %50 {approx = true} : vector<1x8x1xf32> -> vector<1x8x1xf32>
    %52 = vector.broadcast %51 : vector<1x8x1xf32> to vector<1x8x8xf32>
    %53 = arith.mulf %48, %52 : vector<1x8x8xf32>
    %54 = arith.truncf %53 : vector<1x8x8xf32> to vector<1x8x8xbf16>
    %cst_18 = arith.constant dense<0.000000e+00> : vector<1x8x8xf32>
    %55 = tpu.matmul %54, %42, %cst_18 {dimension_numbers = #tpu.dot_dimension_numbers<[2], [1], [1], [2], [0, 0, 0, 1, 1, 2], [0], [0]>} : vector<1x8x8xbf16>, vector<1x8x8xbf16>, vector<1x8x8xf32> -> vector<1x8x8xf32>
    %56 = vector.shape_cast %55 : vector<1x8x8xf32> to vector<8x8xf32>
    %57 = arith.truncf %56 : vector<8x8xf32> to vector<8x8xbf16>
    %c0_19 = arith.constant 0 : index
    %c0_20 = arith.constant 0 : index
    %58 = vector.load %arg17[%c0_19, %c0_20] : memref<8x32xbf16, #tpu.memory_space<vmem>>, vector<8x8xbf16>
    tpu.vector_store %arg17[%c0_19, %c0_20], %57 {strides = array<i32>} : memref<8x32xbf16, #tpu.memory_space<vmem>>, vector<8x8xbf16>,
    %59 = vector.extract_strided_slice %36 {offsets = [0, 8], sizes = [8, 8], strides = [1, 1]} : vector<8x96xbf16> to vector<8x8xbf16>
    %60 = vector.shape_cast %59 : vector<8x8xbf16> to vector<1x8x8xbf16>
    %61 = vector.extract_strided_slice %36 {offsets = [0, 40], sizes = [8, 8], strides = [1, 1]} : vector<8x96xbf16> to vector<8x8xbf16>
    %62 = vector.shape_cast %61 : vector<8x8xbf16> to vector<1x8x8xbf16>
    %63 = vector.extract_strided_slice %36 {offsets = [0, 72], sizes = [8, 8], strides = [1, 1]} : vector<8x96xbf16> to vector<8x8xbf16>
    %64 = vector.shape_cast %63 : vector<8x8xbf16> to vector<1x8x8xbf16>
    %cst_21 = arith.constant dense<0.000000e+00> : vector<1x8x8xf32>
    %65 = tpu.matmul %60, %62, %cst_21 {dimension_numbers = #tpu.dot_dimension_numbers<[2], [2], [1], [1], [0, 0, 0, 1, 1, 1], [0], [0]>} : vector<1x8x8xbf16>, vector<1x8x8xbf16>, vector<1x8x8xf32> -> vector<1x8x8xf32>
    %cst_22 = arith.constant dense<0xFF800000> : vector<1x8xf32>
    %66 = vector.multi_reduction <maximumf>, %65, %cst_22 [2] : vector<1x8x8xf32> to vector<1x8xf32>
    %67 = vector.shape_cast %66 : vector<1x8xf32> to vector<1x8x1xf32>
    %68 = vector.broadcast %67 : vector<1x8x1xf32> to vector<1x8x8xf32>
    %69 = arith.subf %65, %68 : vector<1x8x8xf32>
    %70 = math.exp %69 : vector<1x8x8xf32>
    %cst_23 = arith.constant dense<0.000000e+00> : vector<1x8xf32>
    %71 = vector.multi_reduction <add>, %70, %cst_23 [2] : vector<1x8x8xf32> to vector<1x8xf32>
    %72 = vector.shape_cast %71 : vector<1x8xf32> to vector<1x8x1xf32>
    %73 = tpu.reciprocal %72 {approx = true} : vector<1x8x1xf32> -> vector<1x8x1xf32>
    %74 = vector.broadcast %73 : vector<1x8x1xf32> to vector<1x8x8xf32>
    %75 = arith.mulf %70, %74 : vector<1x8x8xf32>
    %76 = arith.truncf %75 : vector<1x8x8xf32> to vector<1x8x8xbf16>
    %cst_24 = arith.constant dense<0.000000e+00> : vector<1x8x8xf32>
    %77 = tpu.matmul %76, %64, %cst_24 {dimension_numbers = #tpu.dot_dimension_numbers<[2], [1], [1], [2], [0, 0, 0, 1, 1, 2], [0], [0]>} : vector<1x8x8xbf16>, vector<1x8x8xbf16>, vector<1x8x8xf32> -> vector<1x8x8xf32>
    %78 = vector.shape_cast %77 : vector<1x8x8xf32> to vector<8x8xf32>
    %79 = arith.truncf %78 : vector<8x8xf32> to vector<8x8xbf16>
    %c0_25 = arith.constant 0 : index
    %c8 = arith.constant 8 : index
    %80 = vector.load %arg17[%c0_25, %c8] : memref<8x32xbf16, #tpu.memory_space<vmem>>, vector<8x8xbf16>
    tpu.vector_store %arg17[%c0_25, %c8], %79 {strides = array<i32>} : memref<8x32xbf16, #tpu.memory_space<vmem>>, vector<8x8xbf16>,
    %81 = vector.extract_strided_slice %36 {offsets = [0, 16], sizes = [8, 8], strides = [1, 1]} : vector<8x96xbf16> to vector<8x8xbf16>
    %82 = vector.shape_cast %81 : vector<8x8xbf16> to vector<1x8x8xbf16>
    %83 = vector.extract_strided_slice %36 {offsets = [0, 48], sizes = [8, 8], strides = [1, 1]} : vector<8x96xbf16> to vector<8x8xbf16>
    %84 = vector.shape_cast %83 : vector<8x8xbf16> to vector<1x8x8xbf16>
    %85 = vector.extract_strided_slice %36 {offsets = [0, 80], sizes = [8, 8], strides = [1, 1]} : vector<8x96xbf16> to vector<8x8xbf16>
    %86 = vector.shape_cast %85 : vector<8x8xbf16> to vector<1x8x8xbf16>
    %cst_26 = arith.constant dense<0.000000e+00> : vector<1x8x8xf32>
    %87 = tpu.matmul %82, %84, %cst_26 {dimension_numbers = #tpu.dot_dimension_numbers<[2], [2], [1], [1], [0, 0, 0, 1, 1, 1], [0], [0]>} : vector<1x8x8xbf16>, vector<1x8x8xbf16>, vector<1x8x8xf32> -> vector<1x8x8xf32>
    %cst_27 = arith.constant dense<0xFF800000> : vector<1x8xf32>
    %88 = vector.multi_reduction <maximumf>, %87, %cst_27 [2] : vector<1x8x8xf32> to vector<1x8xf32>
    %89 = vector.shape_cast %88 : vector<1x8xf32> to vector<1x8x1xf32>
    %90 = vector.broadcast %89 : vector<1x8x1xf32> to vector<1x8x8xf32>
    %91 = arith.subf %87, %90 : vector<1x8x8xf32>
    %92 = math.exp %91 : vector<1x8x8xf32>
    %cst_28 = arith.constant dense<0.000000e+00> : vector<1x8xf32>
    %93 = vector.multi_reduction <add>, %92, %cst_28 [2] : vector<1x8x8xf32> to vector<1x8xf32>
    %94 = vector.shape_cast %93 : vector<1x8xf32> to vector<1x8x1xf32>
    %95 = tpu.reciprocal %94 {approx = true} : vector<1x8x1xf32> -> vector<1x8x1xf32>
    %96 = vector.broadcast %95 : vector<1x8x1xf32> to vector<1x8x8xf32>
    %97 = arith.mulf %92, %96 : vector<1x8x8xf32>
    %98 = arith.truncf %97 : vector<1x8x8xf32> to vector<1x8x8xbf16>
    %cst_29 = arith.constant dense<0.000000e+00> : vector<1x8x8xf32>
    %99 = tpu.matmul %98, %86, %cst_29 {dimension_numbers = #tpu.dot_dimension_numbers<[2], [1], [1], [2], [0, 0, 0, 1, 1, 2], [0], [0]>} : vector<1x8x8xbf16>, vector<1x8x8xbf16>, vector<1x8x8xf32> -> vector<1x8x8xf32>
    %100 = vector.shape_cast %99 : vector<1x8x8xf32> to vector<8x8xf32>
    %101 = arith.truncf %100 : vector<8x8xf32> to vector<8x8xbf16>
    %c0_30 = arith.constant 0 : index
    %c16 = arith.constant 16 : index
    %102 = vector.load %arg17[%c0_30, %c16] : memref<8x32xbf16, #tpu.memory_space<vmem>>, vector<8x8xbf16>
    tpu.vector_store %arg17[%c0_30, %c16], %101 {strides = array<i32>} : memref<8x32xbf16, #tpu.memory_space<vmem>>, vector<8x8xbf16>,
    %103 = vector.extract_strided_slice %36 {offsets = [0, 24], sizes = [8, 8], strides = [1, 1]} : vector<8x96xbf16> to vector<8x8xbf16>
    %104 = vector.shape_cast %103 : vector<8x8xbf16> to vector<1x8x8xbf16>
    %105 = vector.extract_strided_slice %36 {offsets = [0, 56], sizes = [8, 8], strides = [1, 1]} : vector<8x96xbf16> to vector<8x8xbf16>
    %106 = vector.shape_cast %105 : vector<8x8xbf16> to vector<1x8x8xbf16>
    %107 = vector.extract_strided_slice %36 {offsets = [0, 88], sizes = [8, 8], strides = [1, 1]} : vector<8x96xbf16> to vector<8x8xbf16>
    %108 = vector.shape_cast %107 : vector<8x8xbf16> to vector<1x8x8xbf16>
    %cst_31 = arith.constant dense<0.000000e+00> : vector<1x8x8xf32>
    %109 = tpu.matmul %104, %106, %cst_31 {dimension_numbers = #tpu.dot_dimension_numbers<[2], [2], [1], [1], [0, 0, 0, 1, 1, 1], [0], [0]>} : vector<1x8x8xbf16>, vector<1x8x8xbf16>, vector<1x8x8xf32> -> vector<1x8x8xf32>
    %cst_32 = arith.constant dense<0xFF800000> : vector<1x8xf32>
    %110 = vector.multi_reduction <maximumf>, %109, %cst_32 [2] : vector<1x8x8xf32> to vector<1x8xf32>
    %111 = vector.shape_cast %110 : vector<1x8xf32> to vector<1x8x1xf32>
    %112 = vector.broadcast %111 : vector<1x8x1xf32> to vector<1x8x8xf32>
    %113 = arith.subf %109, %112 : vector<1x8x8xf32>
    %114 = math.exp %113 : vector<1x8x8xf32>
    %cst_33 = arith.constant dense<0.000000e+00> : vector<1x8xf32>
    %115 = vector.multi_reduction <add>, %114, %cst_33 [2] : vector<1x8x8xf32> to vector<1x8xf32>
    %116 = vector.shape_cast %115 : vector<1x8xf32> to vector<1x8x1xf32>
    %117 = tpu.reciprocal %116 {approx = true} : vector<1x8x1xf32> -> vector<1x8x1xf32>
    %118 = vector.broadcast %117 : vector<1x8x1xf32> to vector<1x8x8xf32>
    %119 = arith.mulf %114, %118 : vector<1x8x8xf32>
    %120 = arith.truncf %119 : vector<1x8x8xf32> to vector<1x8x8xbf16>
    %cst_34 = arith.constant dense<0.000000e+00> : vector<1x8x8xf32>
    %121 = tpu.matmul %120, %108, %cst_34 {dimension_numbers = #tpu.dot_dimension_numbers<[2], [1], [1], [2], [0, 0, 0, 1, 1, 2], [0], [0]>} : vector<1x8x8xbf16>, vector<1x8x8xbf16>, vector<1x8x8xf32> -> vector<1x8x8xf32>
    %122 = vector.shape_cast %121 : vector<1x8x8xf32> to vector<8x8xf32>
    %123 = arith.truncf %122 : vector<8x8xf32> to vector<8x8xbf16>
    %c0_35 = arith.constant 0 : index
    %c24 = arith.constant 24 : index
    %124 = vector.load %arg17[%c0_35, %c24] : memref<8x32xbf16, #tpu.memory_space<vmem>>, vector<8x8xbf16>
    tpu.vector_store %arg17[%c0_35, %c24], %123 {strides = array<i32>} : memref<8x32xbf16, #tpu.memory_space<vmem>>, vector<8x8xbf16>,
    %c0_36 = arith.constant 0 : index
    %c0_37 = arith.constant 0 : index
    %125 = vector.load %arg17[%c0_36, %c0_37] : memref<8x32xbf16, #tpu.memory_space<vmem>>, vector<8x32xbf16>
    %c0_38 = arith.constant 0 : index
    %c0_39 = arith.constant 0 : index
    %126 = vector.load %arg6[%c0_38, %c0_39] : memref<32x32xbf16, #tpu.memory_space<vmem>>, vector<32x32xbf16>
    %cst_40 = arith.constant dense<0.000000e+00> : vector<8x32xf32>
    %127 = tpu.matmul %125, %126, %cst_40 {dimension_numbers = #tpu.dot_dimension_numbers<[1], [0], [0], [1], [0, 0, 1, 1], [], []>} : vector<8x32xbf16>, vector<32x32xbf16>, vector<8x32xf32> -> vector<8x32xf32>
    %c0_41 = arith.constant 0 : index
    %c0_42 = arith.constant 0 : index
    %128 = vector.load %arg7[%c0_41, %c0_42] : memref<1x32xf32, #tpu.memory_space<vmem>>, vector<1x32xf32>
    %129 = vector.shape_cast %128 : vector<1x32xf32> to vector<32xf32>
    %130 = vector.shape_cast %129 : vector<32xf32> to vector<1x32xf32>
    %131 = vector.broadcast %130 : vector<1x32xf32> to vector<8x32xf32>
    %132 = arith.addf %127, %131 : vector<8x32xf32>
    %133 = arith.addf %1, %132 : vector<8x32xf32>
    %c0_43 = arith.constant 0 : index
    %c0_44 = arith.constant 0 : index
    %134 = vector.load %arg8[%c0_43, %c0_44] : memref<1x32xf32, #tpu.memory_space<vmem>>, vector<1x32xf32>
    %135 = vector.shape_cast %134 : vector<1x32xf32> to vector<32xf32>
    %c0_45 = arith.constant 0 : index
    %c0_46 = arith.constant 0 : index
    %136 = vector.load %arg9[%c0_45, %c0_46] : memref<1x32xf32, #tpu.memory_space<vmem>>, vector<1x32xf32>
    %137 = vector.shape_cast %136 : vector<1x32xf32> to vector<32xf32>
    %cst_47 = arith.constant dense<0.000000e+00> : vector<8xf32>
    %138 = vector.multi_reduction <add>, %133, %cst_47 [1] : vector<8x32xf32> to vector<8xf32>
    %139 = vector.shape_cast %138 : vector<8xf32> to vector<8x1xf32>
    %cst_48 = arith.constant 3.200000e+01 : f32
    %140 = vector.broadcast %cst_48 : f32 to vector<8x1xf32>
    %141 = arith.divf %139, %140 : vector<8x1xf32>
    %142 = vector.broadcast %141 : vector<8x1xf32> to vector<8x32xf32>
    %143 = arith.subf %133, %142 : vector<8x32xf32>
    %144 = arith.mulf %143, %143 : vector<8x32xf32>
    %cst_49 = arith.constant dense<0.000000e+00> : vector<8xf32>
    %145 = vector.multi_reduction <add>, %144, %cst_49 [1] : vector<8x32xf32> to vector<8xf32>
    %146 = vector.shape_cast %145 : vector<8xf32> to vector<8x1xf32>
    %cst_50 = arith.constant 3.200000e+01 : f32
    %147 = vector.broadcast %cst_50 : f32 to vector<8x1xf32>
    %148 = arith.divf %146, %147 : vector<8x1xf32>
    %cst_51 = arith.constant 9.99999997E-7 : f32
    %149 = vector.broadcast %cst_51 : f32 to vector<8x1xf32>
    %150 = arith.addf %148, %149 : vector<8x1xf32>
    %151 = math.rsqrt %150 : vector<8x1xf32>
    %152 = vector.broadcast %151 : vector<8x1xf32> to vector<8x32xf32>
    %153 = arith.mulf %143, %152 : vector<8x32xf32>
    %154 = vector.shape_cast %135 : vector<32xf32> to vector<1x32xf32>
    %155 = vector.broadcast %154 : vector<1x32xf32> to vector<8x32xf32>
    %156 = arith.mulf %153, %155 : vector<8x32xf32>
    %157 = vector.shape_cast %137 : vector<32xf32> to vector<1x32xf32>
    %158 = vector.broadcast %157 : vector<1x32xf32> to vector<8x32xf32>
    %159 = arith.addf %156, %158 : vector<8x32xf32>
    %160 = arith.truncf %159 : vector<8x32xf32> to vector<8x32xbf16>
    %c0_52 = arith.constant 0 : index
    %c0_53 = arith.constant 0 : index
    %161 = vector.load %arg10[%c0_52, %c0_53] : memref<32x64xbf16, #tpu.memory_space<vmem>>, vector<32x64xbf16>
    %cst_54 = arith.constant dense<0.000000e+00> : vector<8x64xf32>
    %162 = tpu.matmul %160, %161, %cst_54 {dimension_numbers = #tpu.dot_dimension_numbers<[1], [0], [0], [1], [0, 0, 1, 1], [], []>} : vector<8x32xbf16>, vector<32x64xbf16>, vector<8x64xf32> -> vector<8x64xf32>
    %c0_55 = arith.constant 0 : index
    %c0_56 = arith.constant 0 : index
    %163 = vector.load %arg11[%c0_55, %c0_56] : memref<1x64xf32, #tpu.memory_space<vmem>>, vector<1x64xf32>
    %164 = vector.shape_cast %163 : vector<1x64xf32> to vector<64xf32>
    %165 = vector.shape_cast %164 : vector<64xf32> to vector<1x64xf32>
    %166 = vector.broadcast %165 : vector<1x64xf32> to vector<8x64xf32>
    %167 = arith.addf %162, %166 : vector<8x64xf32>
    %cst_57 = arith.constant 5.000000e-01 : f32
    %168 = vector.broadcast %cst_57 : f32 to vector<8x64xf32>
    %169 = arith.mulf %168, %167 : vector<8x64xf32>
    %cst_58 = arith.constant 0.707106769 : f32
    %170 = vector.broadcast %cst_58 : f32 to vector<8x64xf32>
    %171 = arith.mulf %167, %170 : vector<8x64xf32>
    %172 = math.erf %171 : vector<8x64xf32>
    %cst_59 = arith.constant 1.000000e+00 : f32
    %173 = vector.broadcast %cst_59 : f32 to vector<8x64xf32>
    %174 = arith.addf %173, %172 : vector<8x64xf32>
    %175 = arith.mulf %169, %174 : vector<8x64xf32>
    %176 = arith.truncf %175 : vector<8x64xf32> to vector<8x64xbf16>
    %c0_60 = arith.constant 0 : index
    %c0_61 = arith.constant 0 : index
    %177 = vector.load %arg12[%c0_60, %c0_61] : memref<64x32xbf16, #tpu.memory_space<vmem>>, vector<64x32xbf16>
    %cst_62 = arith.constant dense<0.000000e+00> : vector<8x32xf32>
    %178 = tpu.matmul %176, %177, %cst_62 {dimension_numbers = #tpu.dot_dimension_numbers<[1], [0], [0], [1], [0, 0, 1, 1], [], []>} : vector<8x64xbf16>, vector<64x32xbf16>, vector<8x32xf32> -> vector<8x32xf32>
    %c0_63 = arith.constant 0 : index
    %c0_64 = arith.constant 0 : index
    %179 = vector.load %arg13[%c0_63, %c0_64] : memref<1x32xf32, #tpu.memory_space<vmem>>, vector<1x32xf32>
    %180 = vector.shape_cast %179 : vector<1x32xf32> to vector<32xf32>
    %181 = vector.shape_cast %180 : vector<32xf32> to vector<1x32xf32>
    %182 = vector.broadcast %181 : vector<1x32xf32> to vector<8x32xf32>
    %183 = arith.addf %178, %182 : vector<8x32xf32>
    %184 = arith.addf %159, %183 : vector<8x32xf32>
    %c0_65 = arith.constant 0 : index
    %c0_66 = arith.constant 0 : index
    %185 = vector.load %arg14[%c0_65, %c0_66] : memref<1x32xf32, #tpu.memory_space<vmem>>, vector<1x32xf32>
    %186 = vector.shape_cast %185 : vector<1x32xf32> to vector<32xf32>
    %c0_67 = arith.constant 0 : index
    %c0_68 = arith.constant 0 : index
    %187 = vector.load %arg15[%c0_67, %c0_68] : memref<1x32xf32, #tpu.memory_space<vmem>>, vector<1x32xf32>
    %188 = vector.shape_cast %187 : vector<1x32xf32> to vector<32xf32>
    %cst_69 = arith.constant dense<0.000000e+00> : vector<8xf32>
    %189 = vector.multi_reduction <add>, %184, %cst_69 [1] : vector<8x32xf32> to vector<8xf32>
    %190 = vector.shape_cast %189 : vector<8xf32> to vector<8x1xf32>
    %cst_70 = arith.constant 3.200000e+01 : f32
    %191 = vector.broadcast %cst_70 : f32 to vector<8x1xf32>
    %192 = arith.divf %190, %191 : vector<8x1xf32>
    %193 = vector.broadcast %192 : vector<8x1xf32> to vector<8x32xf32>
    %194 = arith.subf %184, %193 : vector<8x32xf32>
    %195 = arith.mulf %194, %194 : vector<8x32xf32>
    %cst_71 = arith.constant dense<0.000000e+00> : vector<8xf32>
    %196 = vector.multi_reduction <add>, %195, %cst_71 [1] : vector<8x32xf32> to vector<8xf32>
    %197 = vector.shape_cast %196 : vector<8xf32> to vector<8x1xf32>
    %cst_72 = arith.constant 3.200000e+01 : f32
    %198 = vector.broadcast %cst_72 : f32 to vector<8x1xf32>
    %199 = arith.divf %197, %198 : vector<8x1xf32>
    %cst_73 = arith.constant 9.99999997E-7 : f32
    %200 = vector.broadcast %cst_73 : f32 to vector<8x1xf32>
    %201 = arith.addf %199, %200 : vector<8x1xf32>
    %202 = math.rsqrt %201 : vector<8x1xf32>
    %203 = vector.broadcast %202 : vector<8x1xf32> to vector<8x32xf32>
    %204 = arith.mulf %194, %203 : vector<8x32xf32>
    %205 = vector.shape_cast %186 : vector<32xf32> to vector<1x32xf32>
    %206 = vector.broadcast %205 : vector<1x32xf32> to vector<8x32xf32>
    %207 = arith.mulf %204, %206 : vector<8x32xf32>
    %208 = vector.shape_cast %188 : vector<32xf32> to vector<1x32xf32>
    %209 = vector.broadcast %208 : vector<1x32xf32> to vector<8x32xf32>
    %210 = arith.addf %207, %209 : vector<8x32xf32>
    %211 = vector.shape_cast %210 : vector<8x32xf32> to vector<1x8x32xf32>
    %c0_74 = arith.constant 0 : index
    %c0_75 = arith.constant 0 : index
    %c0_76 = arith.constant 0 : index
    %212 = vector.load %arg16[%c0_74, %c0_75, %c0_76] : memref<1x8x32xf32, #tpu.memory_space<vmem>>, vector<1x8x32xf32>
    tpu.vector_store %arg16[%c0_74, %c0_75, %c0_76], %211 {strides = array<i32>} : memref<1x8x32xf32, #tpu.memory_space<vmem>>, vector<1x8x32xf32>,
    return
  }
  func.func @transform_0(%arg0: i32) -> (i32, i32, i32) {
    %c0_i32 = arith.constant 0 : i32
    %c0_i32_0 = arith.constant 0 : i32
    %c0_i32_1 = arith.constant 0 : i32
    return %arg0, %c0_i32, %c0_i32_0 : i32, i32, i32
  }
  func.func @transform_1(%arg0: i32) -> (i32, i32) {
    %c0_i32 = arith.constant 0 : i32
    %c0_i32_0 = arith.constant 0 : i32
    %c0_i32_1 = arith.constant 0 : i32
    return %c0_i32, %c0_i32_0 : i32, i32
  }
  func.func @transform_2(%arg0: i32) -> (i32, i32) {
    %c0_i32 = arith.constant 0 : i32
    %c0_i32_0 = arith.constant 0 : i32
    %c0_i32_1 = arith.constant 0 : i32
    return %c0_i32, %c0_i32_0 : i32, i32
  }
  func.func @transform_3(%arg0: i32) -> (i32, i32) {
    %c0_i32 = arith.constant 0 : i32
    %c0_i32_0 = arith.constant 0 : i32
    %c0_i32_1 = arith.constant 0 : i32
    return %c0_i32, %c0_i32_0 : i32, i32
  }
  func.func @transform_4(%arg0: i32) -> (i32, i32) {
    %c0_i32 = arith.constant 0 : i32
    %c0_i32_0 = arith.constant 0 : i32
    %c0_i32_1 = arith.constant 0 : i32
    return %c0_i32, %c0_i32_0 : i32, i32
  }
  func.func @transform_5(%arg0: i32) -> (i32, i32) {
    %c0_i32 = arith.constant 0 : i32
    %c0_i32_0 = arith.constant 0 : i32
    %c0_i32_1 = arith.constant 0 : i32
    return %c0_i32, %c0_i32_0 : i32, i32
  }
  func.func @transform_6(%arg0: i32) -> (i32, i32) {
    %c0_i32 = arith.constant 0 : i32
    %c0_i32_0 = arith.constant 0 : i32
    %c0_i32_1 = arith.constant 0 : i32
    return %c0_i32, %c0_i32_0 : i32, i32
  }
  func.func @transform_7(%arg0: i32) -> (i32, i32) {
    %c0_i32 = arith.constant 0 : i32
    %c0_i32_0 = arith.constant 0 : i32
    %c0_i32_1 = arith.constant 0 : i32
    return %c0_i32, %c0_i32_0 : i32, i32
  }
  func.func @transform_8(%arg0: i32) -> (i32, i32) {
    %c0_i32 = arith.constant 0 : i32
    %c0_i32_0 = arith.constant 0 : i32
    %c0_i32_1 = arith.constant 0 : i32
    return %c0_i32, %c0_i32_0 : i32, i32
  }
  func.func @transform_9(%arg0: i32) -> (i32, i32) {
    %c0_i32 = arith.constant 0 : i32
    %c0_i32_0 = arith.constant 0 : i32
    %c0_i32_1 = arith.constant 0 : i32
    return %c0_i32, %c0_i32_0 : i32, i32
  }
  func.func @transform_10(%arg0: i32) -> (i32, i32) {
    %c0_i32 = arith.constant 0 : i32
    %c0_i32_0 = arith.constant 0 : i32
    %c0_i32_1 = arith.constant 0 : i32
    return %c0_i32, %c0_i32_0 : i32, i32
  }
  func.func @transform_11(%arg0: i32) -> (i32, i32) {
    %c0_i32 = arith.constant 0 : i32
    %c0_i32_0 = arith.constant 0 : i32
    %c0_i32_1 = arith.constant 0 : i32
    return %c0_i32, %c0_i32_0 : i32, i32
  }
  func.func @transform_12(%arg0: i32) -> (i32, i32) {
    %c0_i32 = arith.constant 0 : i32
    %c0_i32_0 = arith.constant 0 : i32
    %c0_i32_1 = arith.constant 0 : i32
    return %c0_i32, %c0_i32_0 : i32, i32
  }
  func.func @transform_13(%arg0: i32) -> (i32, i32) {
    %c0_i32 = arith.constant 0 : i32
    %c0_i32_0 = arith.constant 0 : i32
    %c0_i32_1 = arith.constant 0 : i32
    return %c0_i32, %c0_i32_0 : i32, i32
  }
  func.func @transform_14(%arg0: i32) -> (i32, i32) {
    %c0_i32 = arith.constant 0 : i32
    %c0_i32_0 = arith.constant 0 : i32
    %c0_i32_1 = arith.constant 0 : i32
    return %c0_i32, %c0_i32_0 : i32, i32
  }
  func.func @transform_15(%arg0: i32) -> (i32, i32, i32) {
    %c0_i32 = arith.constant 0 : i32
    %c0_i32_0 = arith.constant 0 : i32
    %c0_i32_1 = arith.constant 0 : i32
    return %arg0, %c0_i32, %c0_i32_0 : i32, i32, i32
  }
}

</mosaic_0001>

<llo_original>
// kernel: tpu_custom_call.1
$region0: #{tpu_custom_call.1}
  #allocation0 [shape = 'u32[]', space=smem, size = 0x4, offset = 0x4, fixed_abs, tag = 'smem constant byte address 0x4 - core index']
  #allocation1 [shape = 'u32[72,128]{1,0:T(1,128)}', space=vmem, size = 0x9000, scoped, tag = 'internal scratch']
  #allocation2 [shape = 'bf16[8,32]{1,0:T(8,128)(2,1)}', space=vmem, size = 0x800, scoped, tag = 'scratch operand']
  %s0 = inlined_call_operand.vmem [shape: f32[2,8,32], index: 0, kind: input, shape index: {}]
  %s1 = inlined_call_operand.hbm [shape: f32[1,32], index: 1, kind: input, shape index: {}]
  %s2 = inlined_call_operand.vmem [shape: f32[1,32], index: 2, kind: input, shape index: {}]
  %s3 = inlined_call_operand.vmem [shape: bf16[32,96], index: 3, kind: input, shape index: {}]
  %s4 = inlined_call_operand.vmem [shape: f32[1,96], index: 4, kind: input, shape index: {}]
  %s5 = inlined_call_operand.vmem [shape: bf16[32,32], index: 5, kind: input, shape index: {}]
  %s6 = inlined_call_operand.vmem [shape: f32[1,32], index: 6, kind: input, shape index: {}]
  %s7 = inlined_call_operand.vmem [shape: f32[1,32], index: 7, kind: input, shape index: {}]
  %s8 = inlined_call_operand.vmem [shape: f32[1,32], index: 8, kind: input, shape index: {}]
  %s9 = inlined_call_operand.hbm [shape: bf16[32,64], index: 9, kind: input, shape index: {}]
  %s10 = inlined_call_operand.vmem [shape: f32[1,64], index: 10, kind: input, shape index: {}]
  %s11 = inlined_call_operand.vmem [shape: bf16[64,32], index: 11, kind: input, shape index: {}]
  %s12 = inlined_call_operand.vmem [shape: f32[1,32], index: 12, kind: input, shape index: {}]
  %s13 = inlined_call_operand.vmem [shape: f32[1,32], index: 13, kind: input, shape index: {}]
  %s14 = inlined_call_operand.vmem [shape: f32[1,32], index: 14, kind: input, shape index: {}]
  %s15 = inlined_call_operand.hbm [shape: f32[2,8,32], index: 15, kind: output, shape index: {}]
  %s16 = sld [smem:[#allocation0]]
  $region101: #{tpu_custom_call.1} parent=0
    _
  %s18 = ssub.s32 1, %s16
  %s19 = scalar_select 0, %s18, %s16
  $region1: #{tpu_custom_call.1} parent=0
    #allocation3 [shape = 'u8[512]{0}', space=vmem, size = 0x400, scoped, tag = 'input window, operand 1, single buffered']
    #allocation4 [shape = 's32[2]{0}', space=sflag, size = 0x8, scoped, tag = 'scoped memory for tpu_custom_call.1']
    #allocation5 [shape = 's32[2]{0}', space=sflag, size = 0x8, scoped, tag = 'scoped memory for tpu_custom_call.1']
    #allocation6 [shape = 'u8[8192]{0}', space=vmem, size = 0x2000, scoped, tag = 'input window, operand 9, single buffered']
    #allocation7 [shape = 's32[1]{0}', space=sflag, size = 0x4, scoped, tag = 'scoped memory for tpu_custom_call.1']
    #allocation8 [shape = 'u8[8192]{0}', space=vmem, size = 0x2000, scoped, tag = 'output window, operand 0']
    %20 = vsyncpa [#allocation4], 0
    %21 = vsyncpa [#allocation7], 0
    %22 = vsyncpa [#allocation5], 0
    %s23 = scalar_lea.sflag [#allocation5], 1
    %24 = vsyncpa %s23, 0
    loop: start=0, step=1, limit=4
    $region2: #{tpu_custom_call.1} parent=1 // loop_pre_header
      _
    $region3: #{tpu_custom_call.1} parent=1 // loop_header
      %s26 = sphi 0, %s30
      %p27 = scmp.ge.s32.totalorder %s26, 4
      %s36 = sphi 0, %s38
      %s39 = sphi 0, %s36
      %s40 = sphi 0, %s39
      %s56 = sphi 0, %s40
      %s60 = sphi 0, %s60
      %s62 = sphi 0, %s60
      %s63 = sphi 0, %s62
      %s77 = sphi 0, %s63
      %s81 = sphi 0, %s81
      %s83 = sphi 0, %s81
      %s84 = sphi 0, %s83
      %s98 = sphi 0, %s84
      %s102 = sphi 0, %s102
      %s104 = sphi 0, %s102
      %s105 = sphi 0, %s104
      %s119 = sphi 0, %s105
      %s123 = sphi 0, %s123
      %s125 = sphi 0, %s123
      %s126 = sphi 0, %s125
      %s140 = sphi 0, %s126
      %s144 = sphi 0, %s144
      %s146 = sphi 0, %s144
      %s147 = sphi 0, %s146
      %s161 = sphi 0, %s147
      %s165 = sphi 0, %s165
      %s167 = sphi 0, %s165
      %s168 = sphi 0, %s167
      %s182 = sphi 0, %s168
      %s186 = sphi 0, %s186
      %s188 = sphi 0, %s186
      %s189 = sphi 0, %s188
      %s203 = sphi 0, %s189
      %s207 = sphi 0, %s207
      %s209 = sphi 0, %s207
      %s210 = sphi 0, %s209
      %s224 = sphi 0, %s210
      %s228 = sphi 0, %s228
      %s230 = sphi 0, %s228
      %s231 = sphi 0, %s230
      %s245 = sphi 0, %s231
      %s249 = sphi 0, %s249
      %s251 = sphi 0, %s249
      %s252 = sphi 0, %s251
      %s266 = sphi 0, %s252
      %s270 = sphi 0, %s270
      %s272 = sphi 0, %s270
      %s273 = sphi 0, %s272
      %s287 = sphi 0, %s273
      %s291 = sphi 0, %s291
      %s293 = sphi 0, %s291
      %s294 = sphi 0, %s293
      %s308 = sphi 0, %s294
      %s312 = sphi 0, %s312
      %s314 = sphi 0, %s312
      %s315 = sphi 0, %s314
      %s329 = sphi 0, %s315
      %s333 = sphi 0, %s333
      %s335 = sphi 0, %s333
      %s336 = sphi 0, %s335
      %s350 = sphi 0, %s336
      %s356 = sphi 0, %s358
      %s359 = sphi 0, %s356
      %s360 = sphi 0, %s359
      %s376 = sphi 0, %s360
    $region4: #{tpu_custom_call.1} parent=1 // loop_header_branch
      %29 = sbr.rel (%p27) target = $region8
    $region5: #{tpu_custom_call.1} parent=1 // loop_body
      %s31 = ssub.s32 %s26, 1
      %s32 = ssub.s32 %s26, 2
      %s33 = sadd.s32 %s26, 1
      %s34 = ssub.s32 %s26, %s33
      %p35 = scmp.eq.s32.totalorder %s34, 0
      %s37 = sadd.s32 %s36, 1
      %s38 = scalar_select %p35, %s36, %s37
      %p41 = pneg %p35
      %p42 = scmp.eq.s32.totalorder %s26, 1
      %p43 = por %p41, %p42
      %p44 = scmp.ne.s32.totalorder %s36, %s39
      %p45 = scmp.eq.s32.totalorder %s26, 0
      %p46 = por %p44, %p45
      %p47 = scmp.ne.s32.totalorder %s36, %s39
      %p48 = scmp.eq.s32.totalorder %s31, 1
      %p49 = por %p47, %p48
      %p50 = scmp.ne.s32.totalorder %s39, %s40
      %p51 = scmp.eq.s32.totalorder %s31, 0
      %p52 = por %p50, %p51
      %p53 = scmp.ne.s32.totalorder %s39, %s40
      %p54 = scmp.eq.s32.totalorder %s32, 1
      %p55 = por %p53, %p54
      %p57 = scmp.ne.s32.totalorder %s40, %s56
      %p58 = scmp.eq.s32.totalorder %s32, 0
      %p59 = por %p57, %p58
      %s61 = sadd.s32 %s60, 1
      %p64 = scmp.eq.s32.totalorder %s26, 1
      %p65 = scmp.ne.s32.totalorder %s60, %s62
      %p66 = scmp.eq.s32.totalorder %s26, 0
      %p67 = por %p65, %p66
      %p68 = scmp.ne.s32.totalorder %s60, %s62
      %p69 = scmp.eq.s32.totalorder %s31, 1
      %p70 = por %p68, %p69
      %p71 = scmp.ne.s32.totalorder %s62, %s63
      %p72 = scmp.eq.s32.totalorder %s31, 0
      %p73 = por %p71, %p72
      %p74 = scmp.ne.s32.totalorder %s62, %s63
      %p75 = scmp.eq.s32.totalorder %s32, 1
      %p76 = por %p74, %p75
      %p78 = scmp.ne.s32.totalorder %s63, %s77
      %p79 = scmp.eq.s32.totalorder %s32, 0
      %p80 = por %p78, %p79
      %s82 = sadd.s32 %s81, 1
      %p85 = scmp.eq.s32.totalorder %s26, 1
      %p86 = scmp.ne.s32.totalorder %s81, %s83
      %p87 = scmp.eq.s32.totalorder %s26, 0
      %p88 = por %p86, %p87
      %p89 = scmp.ne.s32.totalorder %s81, %s83
      %p90 = scmp.eq.s32.totalorder %s31, 1
      %p91 = por %p89, %p90
      %p92 = scmp.ne.s32.totalorder %s83, %s84
      %p93 = scmp.eq.s32.totalorder %s31, 0
      %p94 = por %p92, %p93
      %p95 = scmp.ne.s32.totalorder %s83, %s84
      %p96 = scmp.eq.s32.totalorder %s32, 1
      %p97 = por %p95, %p96
      %p99 = scmp.ne.s32.totalorder %s84, %s98
      %p100 = scmp.eq.s32.totalorder %s32, 0
      %p101 = por %p99, %p100
      %s103 = sadd.s32 %s102, 1
      %p106 = scmp.eq.s32.totalorder %s26, 1
      %p107 = scmp.ne.s32.totalorder %s102, %s104
      %p108 = scmp.eq.s32.totalorder %s26, 0
      %p109 = por %p107, %p108
      %p110 = scmp.ne.s32.totalorder %s102, %s104
      %p111 = scmp.eq.s32.totalorder %s31, 1
      %p112 = por %p110, %p111
      %p113 = scmp.ne.s32.totalorder %s104, %s105
      %p114 = scmp.eq.s32.totalorder %s31, 0
      %p115 = por %p113, %p114
      %p116 = scmp.ne.s32.totalorder %s104, %s105
      %p117 = scmp.eq.s32.totalorder %s32, 1
      %p118 = por %p116, %p117
      %p120 = scmp.ne.s32.totalorder %s105, %s119
      %p121 = scmp.eq.s32.totalorder %s32, 0
      %p122 = por %p120, %p121
      %s124 = sadd.s32 %s123, 1
      %p127 = scmp.eq.s32.totalorder %s26, 1
      %p128 = scmp.ne.s32.totalorder %s123, %s125
      %p129 = scmp.eq.s32.totalorder %s26, 0
      %p130 = por %p128, %p129
      %p131 = scmp.ne.s32.totalorder %s123, %s125
      %p132 = scmp.eq.s32.totalorder %s31, 1
      %p133 = por %p131, %p132
      %p134 = scmp.ne.s32.totalorder %s125, %s126
      %p135 = scmp.eq.s32.totalorder %s31, 0
      %p136 = por %p134, %p135
      %p137 = scmp.ne.s32.totalorder %s125, %s126
      %p138 = scmp.eq.s32.totalorder %s32, 1
      %p139 = por %p137, %p138
      %p141 = scmp.ne.s32.totalorder %s126, %s140
      %p142 = scmp.eq.s32.totalorder %s32, 0
      %p143 = por %p141, %p142
      %s145 = sadd.s32 %s144, 1
      %p148 = scmp.eq.s32.totalorder %s26, 1
      %p149 = scmp.ne.s32.totalorder %s144, %s146
      %p150 = scmp.eq.s32.totalorder %s26, 0
      %p151 = por %p149, %p150
      %p152 = scmp.ne.s32.totalorder %s144, %s146
      %p153 = scmp.eq.s32.totalorder %s31, 1
      %p154 = por %p152, %p153
      %p155 = scmp.ne.s32.totalorder %s146, %s147
      %p156 = scmp.eq.s32.totalorder %s31, 0
      %p157 = por %p155, %p156
      %p158 = scmp.ne.s32.totalorder %s146, %s147
      %p159 = scmp.eq.s32.totalorder %s32, 1
      %p160 = por %p158, %p159
      %p162 = scmp.ne.s32.totalorder %s147, %s161
      %p163 = scmp.eq.s32.totalorder %s32, 0
      %p164 = por %p162, %p163
      %s166 = sadd.s32 %s165, 1
      %p169 = scmp.eq.s32.totalorder %s26, 1
      %p170 = scmp.ne.s32.totalorder %s165, %s167
      %p171 = scmp.eq.s32.totalorder %s26, 0
      %p172 = por %p170, %p171
      %p173 = scmp.ne.s32.totalorder %s165, %s167
      %p174 = scmp.eq.s32.totalorder %s31, 1
      %p175 = por %p173, %p174
      %p176 = scmp.ne.s32.totalorder %s167, %s168
      %p177 = scmp.eq.s32.totalorder %s31, 0
      %p178 = por %p176, %p177
      %p179 = scmp.ne.s32.totalorder %s167, %s168
      %p180 = scmp.eq.s32.totalorder %s32, 1
      %p181 = por %p179, %p180
      %p183 = scmp.ne.s32.totalorder %s168, %s182
      %p184 = scmp.eq.s32.totalorder %s32, 0
      %p185 = por %p183, %p184
      %s187 = sadd.s32 %s186, 1
      %p190 = scmp.eq.s32.totalorder %s26, 1
      %p191 = scmp.ne.s32.totalorder %s186, %s188
      %p192 = scmp.eq.s32.totalorder %s26, 0
      %p193 = por %p191, %p192
      %p194 = scmp.ne.s32.totalorder %s186, %s188
      %p195 = scmp.eq.s32.totalorder %s31, 1
      %p196 = por %p194, %p195
      %p197 = scmp.ne.s32.totalorder %s188, %s189
      %p198 = scmp.eq.s32.totalorder %s31, 0
      %p199 = por %p197, %p198
      %p200 = scmp.ne.s32.totalorder %s188, %s189
      %p201 = scmp.eq.s32.totalorder %s32, 1
      %p202 = por %p200, %p201
      %p204 = scmp.ne.s32.totalorder %s189, %s203
      %p205 = scmp.eq.s32.totalorder %s32, 0
      %p206 = por %p204, %p205
      %s208 = sadd.s32 %s207, 1
      %p211 = scmp.eq.s32.totalorder %s26, 1
      %p212 = scmp.ne.s32.totalorder %s207, %s209
      %p213 = scmp.eq.s32.totalorder %s26, 0
      %p214 = por %p212, %p213
      %p215 = scmp.ne.s32.totalorder %s207, %s209
      %p216 = scmp.eq.s32.totalorder %s31, 1
      %p217 = por %p215, %p216
      %p218 = scmp.ne.s32.totalorder %s209, %s210
      %p219 = scmp.eq.s32.totalorder %s31, 0
      %p220 = por %p218, %p219
      %p221 = scmp.ne.s32.totalorder %s209, %s210
      %p222 = scmp.eq.s32.totalorder %s32, 1
      %p223 = por %p221, %p222
      %p225 = scmp.ne.s32.totalorder %s210, %s224
      %p226 = scmp.eq.s32.totalorder %s32, 0
      %p227 = por %p225, %p226
      %s229 = sadd.s32 %s228, 1
      %p232 = scmp.eq.s32.totalorder %s26, 1
      %p233 = scmp.ne.s32.totalorder %s228, %s230
      %p234 = scmp.eq.s32.totalorder %s26, 0
      %p235 = por %p233, %p234
      %p236 = scmp.ne.s32.totalorder %s228, %s230
      %p237 = scmp.eq.s32.totalorder %s31, 1
      %p238 = por %p236, %p237
      %p239 = scmp.ne.s32.totalorder %s230, %s231
      %p240 = scmp.eq.s32.totalorder %s31, 0
      %p241 = por %p239, %p240
      %p242 = scmp.ne.s32.totalorder %s230, %s231
      %p243 = scmp.eq.s32.totalorder %s32, 1
      %p244 = por %p242, %p243
      %p246 = scmp.ne.s32.totalorder %s231, %s245
      %p247 = scmp.eq.s32.totalorder %s32, 0
      %p248 = por %p246, %p247
      %s250 = sadd.s32 %s249, 1
      %p253 = scmp.eq.s32.totalorder %s26, 1
      %p254 = scmp.ne.s32.totalorder %s249, %s251
      %p255 = scmp.eq.s32.totalorder %s26, 0
      %p256 = por %p254, %p255
      %p257 = scmp.ne.s32.totalorder %s249, %s251
      %p258 = scmp.eq.s32.totalorder %s31, 1
      %p259 = por %p257, %p258
      %p260 = scmp.ne.s32.totalorder %s251, %s252
      %p261 = scmp.eq.s32.totalorder %s31, 0
      %p262 = por %p260, %p261
      %p263 = scmp.ne.s32.totalorder %s251, %s252
      %p264 = scmp.eq.s32.totalorder %s32, 1
      %p265 = por %p263, %p264
      %p267 = scmp.ne.s32.totalorder %s252, %s266
      %p268 = scmp.eq.s32.totalorder %s32, 0
      %p269 = por %p267, %p268
      %s271 = sadd.s32 %s270, 1
      %p274 = scmp.eq.s32.totalorder %s26, 1
      %p275 = scmp.ne.s32.totalorder %s270, %s272
      %p276 = scmp.eq.s32.totalorder %s26, 0
      %p277 = por %p275, %p276
      %p278 = scmp.ne.s32.totalorder %s270, %s272
      %p279 = scmp.eq.s32.totalorder %s31, 1
      %p280 = por %p278, %p279
      %p281 = scmp.ne.s32.totalorder %s272, %s273
      %p282 = scmp.eq.s32.totalorder %s31, 0
      %p283 = por %p281, %p282
      %p284 = scmp.ne.s32.totalorder %s272, %s273
      %p285 = scmp.eq.s32.totalorder %s32, 1
      %p286 = por %p284, %p285
      %p288 = scmp.ne.s32.totalorder %s273, %s287
      %p289 = scmp.eq.s32.totalorder %s32, 0
      %p290 = por %p288, %p289
      %s292 = sadd.s32 %s291, 1
      %p295 = scmp.eq.s32.totalorder %s26, 1
      %p296 = scmp.ne.s32.totalorder %s291, %s293
      %p297 = scmp.eq.s32.totalorder %s26, 0
      %p298 = por %p296, %p297
      %p299 = scmp.ne.s32.totalorder %s291, %s293
      %p300 = scmp.eq.s32.totalorder %s31, 1
      %p301 = por %p299, %p300
      %p302 = scmp.ne.s32.totalorder %s293, %s294
      %p303 = scmp.eq.s32.totalorder %s31, 0
      %p304 = por %p302, %p303
      %p305 = scmp.ne.s32.totalorder %s293, %s294
      %p306 = scmp.eq.s32.totalorder %s32, 1
      %p307 = por %p305, %p306
      %p309 = scmp.ne.s32.totalorder %s294, %s308
      %p310 = scmp.eq.s32.totalorder %s32, 0
      %p311 = por %p309, %p310
      %s313 = sadd.s32 %s312, 1
      %p316 = scmp.eq.s32.totalorder %s26, 1
      %p317 = scmp.ne.s32.totalorder %s312, %s314
      %p318 = scmp.eq.s32.totalorder %s26, 0
      %p319 = por %p317, %p318
      %p320 = scmp.ne.s32.totalorder %s312, %s314
      %p321 = scmp.eq.s32.totalorder %s31, 1
      %p322 = por %p320, %p321
      %p323 = scmp.ne.s32.totalorder %s314, %s315
      %p324 = scmp.eq.s32.totalorder %s31, 0
      %p325 = por %p323, %p324
      %p326 = scmp.ne.s32.totalorder %s314, %s315
      %p327 = scmp.eq.s32.totalorder %s32, 1
      %p328 = por %p326, %p327
      %p330 = scmp.ne.s32.totalorder %s315, %s329
      %p331 = scmp.eq.s32.totalorder %s32, 0
      %p332 = por %p330, %p331
      %s334 = sadd.s32 %s333, 1
      %p337 = scmp.eq.s32.totalorder %s26, 1
      %p338 = scmp.ne.s32.totalorder %s333, %s335
      %p339 = scmp.eq.s32.totalorder %s26, 0
      %p340 = por %p338, %p339
      %p341 = scmp.ne.s32.totalorder %s333, %s335
      %p342 = scmp.eq.s32.totalorder %s31, 1
      %p343 = por %p341, %p342
      %p344 = scmp.ne.s32.totalorder %s335, %s336
      %p345 = scmp.eq.s32.totalorder %s31, 0
      %p346 = por %p344, %p345
      %p347 = scmp.ne.s32.totalorder %s335, %s336
      %p348 = scmp.eq.s32.totalorder %s32, 1
      %p349 = por %p347, %p348
      %p351 = scmp.ne.s32.totalorder %s336, %s350
      %p352 = scmp.eq.s32.totalorder %s32, 0
      %p353 = por %p351, %p352
      %s354 = ssub.s32 %s26, %s33
      %p355 = scmp.eq.s32.totalorder %s354, 0
      %s357 = sadd.s32 %s356, 1
      %s358 = scalar_select %p355, %s356, %s357
      %p361 = pneg %p355
      %p362 = scmp.eq.s32.totalorder %s26, 1
      %p363 = por %p361, %p362
      %p364 = scmp.ne.s32.totalorder %s356, %s359
      %p365 = scmp.eq.s32.totalorder %s26, 0
      %p366 = por %p364, %p365
      %p367 = scmp.ne.s32.totalorder %s356, %s359
      %p368 = scmp.eq.s32.totalorder %s31, 1
      %p369 = por %p367, %p368
      %p370 = scmp.ne.s32.totalorder %s359, %s360
      %p371 = scmp.eq.s32.totalorder %s31, 0
      %p372 = por %p370, %p371
      %p373 = scmp.ne.s32.totalorder %s359, %s360
      %p374 = scmp.eq.s32.totalorder %s32, 1
      %p375 = por %p373, %p374
      %p377 = scmp.ne.s32.totalorder %s360, %s376
      %p378 = scmp.eq.s32.totalorder %s32, 0
      %p379 = por %p377, %p378
      %p380 = scmp.le.s32.totalorder 1, %s26
      %p381 = scmp.lt.s32.totalorder %s26, 3
      %p382 = pnand %p380, %p381
      %p383 = pneg %p382
      // Predicated region
      $region9: #{tpu_custom_call.1} parent=5 // pred_check
        _
      $region10: #{tpu_custom_call.1} parent=5 // pred_check_branch
        %385 = sbr.rel (%p382) target = $region12
      $region11: #{tpu_custom_call.1} parent=5 // pred_region
        %s386 = ssub.s32 %s26, 1
        // Predicated region
        $region13: #{tpu_custom_call.1} parent=11 // pred_check
          %p387 = pneg %p73
        $region14: #{tpu_custom_call.1} parent=11 // pred_check_branch
          %389 = sbr.rel (%p387) target = $region16
        $region15: #{tpu_custom_call.1} parent=11 // pred_region
          %391 = vsyncadd [#allocation4], 0
          %s393 = sshll.u32 %s1, 4
          %s394 = int_to_ptr.hbm [resolvable:$true] %s393
          %s395 = sshll.u32 [#allocation3], 4
          %s396 = int_to_ptr.vmem [resolvable:$true] %s395
          %398 = dma.hbm_to_vmem [thread:$0]  %s394, 16, %s396, [#allocation4]
        $region16: #{tpu_custom_call.1} parent=11 // pred_fallthru
          _
        // Predicated region
        $region17: #{tpu_custom_call.1} parent=11 // pred_check
          %p399 = pneg %p94
        $region18: #{tpu_custom_call.1} parent=11 // pred_check_branch
          %401 = sbr.rel (%p399) target = $region20
        $region19: #{tpu_custom_call.1} parent=11 // pred_region
          _
        $region20: #{tpu_custom_call.1} parent=11 // pred_fallthru
          _
        // Predicated region
        $region21: #{tpu_custom_call.1} parent=11 // pred_check
          %p402 = pneg %p115
        $region22: #{tpu_custom_call.1} parent=11 // pred_check_branch
          %404 = sbr.rel (%p402) target = $region24
        $region23: #{tpu_custom_call.1} parent=11 // pred_region
          _
        $region24: #{tpu_custom_call.1} parent=11 // pred_fallthru
          _
        // Predicated region
        $region25: #{tpu_custom_call.1} parent=11 // pred_check
          %p405 = pneg %p136
        $region26: #{tpu_custom_call.1} parent=11 // pred_check_branch
          %407 = sbr.rel (%p405) target = $region28
        $region27: #{tpu_custom_call.1} parent=11 // pred_region
          _
        $region28: #{tpu_custom_call.1} parent=11 // pred_fallthru
          _
        // Predicated region
        $region29: #{tpu_custom_call.1} parent=11 // pred_check
          %p408 = pneg %p157
        $region30: #{tpu_custom_call.1} parent=11 // pred_check_branch
          %410 = sbr.rel (%p408) target = $region32
        $region31: #{tpu_custom_call.1} parent=11 // pred_region
          _
        $region32: #{tpu_custom_call.1} parent=11 // pred_fallthru
          _
        // Predicated region
        $region33: #{tpu_custom_call.1} parent=11 // pred_check
          %p411 = pneg %p178
        $region34: #{tpu_custom_call.1} parent=11 // pred_check_branch
          %413 = sbr.rel (%p411) target = $region36
        $region35: #{tpu_custom_call.1} parent=11 // pred_region
          _
        $region36: #{tpu_custom_call.1} parent=11 // pred_fallthru
          _
        // Predicated region
        $region37: #{tpu_custom_call.1} parent=11 // pred_check
          %p414 = pneg %p199
        $region38: #{tpu_custom_call.1} parent=11 // pred_check_branch
          %416 = sbr.rel (%p414) target = $region40
        $region39: #{tpu_custom_call.1} parent=11 // pred_region
          _
        $region40: #{tpu_custom_call.1} parent=11 // pred_fallthru
          _
        // Predicated region
        $region41: #{tpu_custom_call.1} parent=11 // pred_check
          %p417 = pneg %p220
        $region42: #{tpu_custom_call.1} parent=11 // pred_check_branch
          %419 = sbr.rel (%p417) target = $region44
        $region43: #{tpu_custom_call.1} parent=11 // pred_region
          _
        $region44: #{tpu_custom_call.1} parent=11 // pred_fallthru
          _
        // Predicated region
        $region45: #{tpu_custom_call.1} parent=11 // pred_check
          %p420 = pneg %p241
        $region46: #{tpu_custom_call.1} parent=11 // pred_check_branch
          %422 = sbr.rel (%p420) target = $region48
        $region47: #{tpu_custom_call.1} parent=11 // pred_region
          %424 = vsyncadd [#allocation7], 0
          %s425 = sshll.u32 %s9, 4
          %s426 = int_to_ptr.hbm [resolvable:$true] %s425
          %s427 = sshll.u32 [#allocation6], 4
          %s428 = int_to_ptr.vmem [resolvable:$true] %s427
          %433 = dma.hbm_to_vmem [thread:$0]  %s426, 256, %s428, [#allocation7], 64, 64, 4
        $region48: #{tpu_custom_call.1} parent=11 // pred_fallthru
          _
        // Predicated region
        $region49: #{tpu_custom_call.1} parent=11 // pred_check
          %p434 = pneg %p262
        $region50: #{tpu_custom_call.1} parent=11 // pred_check_branch
          %436 = sbr.rel (%p434) target = $region52
        $region51: #{tpu_custom_call.1} parent=11 // pred_region
          _
        $region52: #{tpu_custom_call.1} parent=11 // pred_fallthru
          _
        // Predicated region
        $region53: #{tpu_custom_call.1} parent=11 // pred_check
          %p437 = pneg %p283
        $region54: #{tpu_custom_call.1} parent=11 // pred_check_branch
          %439 = sbr.rel (%p437) target = $region56
        $region55: #{tpu_custom_call.1} parent=11 // pred_region
          _
        $region56: #{tpu_custom_call.1} parent=11 // pred_fallthru
          _
        // Predicated region
        $region57: #{tpu_custom_call.1} parent=11 // pred_check
          %p440 = pneg %p304
        $region58: #{tpu_custom_call.1} parent=11 // pred_check_branch
          %442 = sbr.rel (%p440) target = $region60
        $region59: #{tpu_custom_call.1} parent=11 // pred_region
          _
        $region60: #{tpu_custom_call.1} parent=11 // pred_fallthru
          _
        // Predicated region
        $region61: #{tpu_custom_call.1} parent=11 // pred_check
          %p443 = pneg %p325
        $region62: #{tpu_custom_call.1} parent=11 // pred_check_branch
          %445 = sbr.rel (%p443) target = $region64
        $region63: #{tpu_custom_call.1} parent=11 // pred_region
          _
        $region64: #{tpu_custom_call.1} parent=11 // pred_fallthru
          _
        // Predicated region
        $region65: #{tpu_custom_call.1} parent=11 // pred_check
          %p446 = pneg %p346
        $region66: #{tpu_custom_call.1} parent=11 // pred_check_branch
          %448 = sbr.rel (%p446) target = $region68
        $region67: #{tpu_custom_call.1} parent=11 // pred_region
          _
        $region68: #{tpu_custom_call.1} parent=11 // pred_fallthru
          _
      $region12: #{tpu_custom_call.1} parent=5 // pred_fallthru
        _
      %p449 = scmp.lt.s32.totalorder %s26, 2
      // Predicated region
      $region69: #{tpu_custom_call.1} parent=5 // pred_check
        %p450 = pneg %p449
      $region70: #{tpu_custom_call.1} parent=5 // pred_check_branch
        %452 = sbr.rel (%p450) target = $region72
      $region71: #{tpu_custom_call.1} parent=5 // pred_region
        // Predicated region
        $region73: #{tpu_custom_call.1} parent=71 // pred_check
          %p453 = pneg %p46
        $region74: #{tpu_custom_call.1} parent=71 // pred_check_branch
          %455 = sbr.rel (%p453) target = $region76
        $region75: #{tpu_custom_call.1} parent=71 // pred_region
          %p456 = scmp.lt.s32.totalorder %s26, 1
          %s457 = scalar_select %p456, %s26, 1
          %s458 = smul.addr %s457, 8
          %s459 = scalar_lea.vmem %s0, %s458
        $region76: #{tpu_custom_call.1} parent=71 // pred_fallthru
          _
      $region72: #{tpu_custom_call.1} parent=5 // pred_fallthru
        _
      %p460 = scmp.le.s32.totalorder 1, %s26
      %p461 = scmp.lt.s32.totalorder %s26, 3
      %p462 = pnand %p460, %p461
      %p463 = pneg %p462
      // Predicated region
      $region77: #{tpu_custom_call.1} parent=5 // pred_check
        _
      $region78: #{tpu_custom_call.1} parent=5 // pred_check_branch
        %465 = sbr.rel (%p462) target = $region80
      $region79: #{tpu_custom_call.1} parent=5 // pred_region
        %s466 = ssub.s32 %s26, 1
        // Predicated region
        $region81: #{tpu_custom_call.1} parent=79 // pred_check
          %p467 = pneg %p73
        $region82: #{tpu_custom_call.1} parent=79 // pred_check_branch
          %469 = sbr.rel (%p467) target = $region84
        $region83: #{tpu_custom_call.1} parent=79 // pred_region
          %471 = dma.done [#allocation4], 16
        $region84: #{tpu_custom_call.1} parent=79 // pred_fallthru
          _
        // Predicated region
        $region85: #{tpu_custom_call.1} parent=79 // pred_check
          %p472 = pneg %p241
        $region86: #{tpu_custom_call.1} parent=79 // pred_check_branch
          %474 = sbr.rel (%p472) target = $region88
        $region87: #{tpu_custom_call.1} parent=79 // pred_region
          %476 = dma.done [#allocation7], 256
        $region88: #{tpu_custom_call.1} parent=79 // pred_fallthru
          _
        %p477 = scmp.lt.s32.totalorder %s31, 1
        %s478 = scalar_select %p477, %s31, 1
        %s479 = smul.addr %s478, 8
        %s480 = scalar_lea.vmem %s0, %s479
        %p481 = pneg %p52
        %p482 = pneg %p49
        %p483 = pneg %p73
        %p484 = pneg %p70
        %p485 = pneg %p94
        %p486 = pneg %p91
        %p487 = pneg %p115
        %p488 = pneg %p112
        %p489 = pneg %p136
        %p490 = pneg %p133
        %p491 = pneg %p157
        %p492 = pneg %p154
        %p493 = pneg %p178
        %p494 = pneg %p175
        %p495 = pneg %p199
        %p496 = pneg %p196
        %p497 = pneg %p220
        %p498 = pneg %p217
        %p499 = pneg %p241
        %p500 = pneg %p238
        %p501 = pneg %p262
        %p502 = pneg %p259
        %p503 = pneg %p283
        %p504 = pneg %p280
        %p505 = pneg %p304
        %p506 = pneg %p301
        %p507 = pneg %p325
        %p508 = pneg %p322
        %p509 = pneg %p346
        %p510 = pneg %p343
        %p511 = pneg %p372
        %p512 = pneg %p369
        %s513 = sand.u32 %s359, 1
        %s514 = scalar_lea.sflag [#allocation5], %s513
        %s515 = sand.u32 %s359, 1
        %s516 = smul.addr %s515, 8
        %s517 = scalar_lea.vmem [#allocation8], %s516
        %p518 = scmp.lt.s32.totalorder %s31, 1
        %s519 = scalar_select %p518, %s31, 1
        %s520 = smul.addr %s519, 8
        %s521 = scalar_lea.vmem %s0, %s520
        %v523 = vld [vmem:[%s521] sm:$0xff]
        %v524 = vld [vmem:[#allocation3] sm:$0x1]
        %v525 = vld [vmem:[%s2] sm:$0x1]
        %vm526 = vcmask 261120
        %v527 = vsel %vm526, %v523, 0.0
        %528 = vadd.xlane.f32.xlu0 %v527
        %v529 = vpop.xlane.xlu0 %528
        %v530 = vrcp.pop 32.0
        %v531 = vmul.f32 32.0, %v530
        %v532 = vsub.f32 1.0, %v531
        %v533 = vmul.f32 %v530, %v532
        %v534 = vadd.f32 %v530, %v533
        %vm535 = vweird.f32 %v530
        %v536 = vsel %vm535, %v530, %v534
        %v537 = vmul.f32 %v529, %v536
        %v538 = vsub.f32 %v523, %v537
        %v539 = vmul.f32 %v538, %v538
        %v540 = vsel %vm526, %v539, 0.0
        %541 = vadd.xlane.f32.xlu0 %v540
        %v542 = vpop.xlane.xlu0 %541
        %v543 = vmul.f32 %v542, %v536
        %v544 = vadd.f32 %v543, 1e-06
        %v545 = vrsqrt.pop %v544
        %v546 = vmul.f32 %v545, %v544
        %v547 = vmul.f32 %v546, %v545
        %v548 = vmul.f32 0.5, %v547
        %v549 = vsub.f32 1.5, %v548
        %v550 = vmul.f32 %v545, %v549
        %vm551 = vweird.f32 %v544
        %vm552 = vweird.f32 %v545
        %vm553 = vmor %vm551, %vm552
        %v554 = vsel %vm553, %v545, %v550
        %v555 = vmul.f32 %v538, %v554
        %v557 = vperm.slane %v524, 0
        %v559 = vmul.f32 %v555, %v557
        %v561 = vperm.slane %v525, 0
        %v563 = vadd.f32 %v559, %v561
        %v564 = vpack.c.bf16 %v563, %v563
        %v565 = vld [vmem:[%s3] sm:$0xf]
        %v566 = vld [vmem:[%s3 + $0x4] sm:$0xf]
        %v567 = vld [vmem:[%s3 + $0x8] sm:$0xf]
        %v568 = vld [vmem:[%s3 + $0xc] sm:$0xf]
        %v569 = vld [vmem:[%s4] sm:$0x1]
        %v571 = vperm.slane %v569, 0
        %v577 = vunpack.c.l.b16 %v565
        %v578 = vunpack.c.l.b16 %v566
        %v579 = vunpack.c.l.b16 %v567
        %v580 = vunpack.c.l.b16 %v568
        %v581 = vpack.c.b16 %v578, %v577
        %v582 = vpack.c.b16 %v580, %v579
        %v586 = vsel %vm526, %v564, 0
        %588 = vmatpush.bf16.msra.mxu0 0
        %589 = vmatpush.bf16.msra.mxu0 0
        %590 = vmatpush.bf16.msra.mxu0 0
        %591 = vmatpush.bf16.msra.mxu0 0
        %592 = vmatpush.bf16.msra.mxu0 0
        %593 = vmatpush.bf16.msra.mxu0 0
        %594 = vmatpush.bf16.msra.mxu0 %v582
        %595 = vmatpush.bf16.msra.mxu0 %v581
        %596 = vmatmul.bf16.gmra.mxu0 %v586
        %v597 = vpop.f32.mrf.mxu0
        %v598 = vadd.f32 %v571, %v597
        %v599 = vpop.f32.mrf.mxu0
        %600 = vdwg.mxu0
        %v601 = vpack.c.bf16 %v598, %v598
        %v603 = vunpack.c.l.b16 %v601
        %v604 = vpack.c.b16 %v603, %v603
        %605 = vrot.lane.b32.xlu0 %v604, 96
        %v606 = vpop.permute.xlu0 %605
        %vm607 = vcmask 64512
        %v609 = vsel %vm607, %v601, 0
        %v612 = vsel %vm607, %v606, 0
        %614 = vmatpush.bf16.xpose.msra.mxu0 0
        %615 = vmatpush.bf16.xpose.msra.mxu0 0
        %616 = vmatpush.bf16.xpose.msra.mxu0 0
        %617 = vmatpush.bf16.xpose.msra.mxu0 0
        %618 = vmatpush.bf16.xpose.msra.mxu0 0
        %619 = vmatpush.bf16.xpose.msra.mxu0 0
        %620 = vmatpush.bf16.xpose.msra.mxu0 0
        %621 = vmatpush.bf16.xpose.msra.mxu0 %v612
        %622 = vmatmul.bf16.gmra.mxu0 %v609
        %v623 = vpop.f32.mrf.mxu0
        %v624 = vadd.f32 0.0, %v623
        %v625 = vpop.f32.mrf.mxu0
        %626 = vdwg.mxu0
        %v627 = vsel %vm607, %v624, -inf
        %628 = vmax.xlane.f32.xlu0 %v627
        %v629 = vpop.xlane.xlu0 %628
        %v630 = vsub.f32 %v624, %v629
        %v631 = vmul.f32 %v630, 1.442695
        %v632 = vpow.pop %v631
        %v633 = vsel %vm607, %v632, 0.0
        %634 = vadd.xlane.f32.xlu0 %v633
        %v635 = vpop.xlane.xlu0 %634
        %v636 = vrcp.pop %v635
        %v637 = vmul.f32 %v632, %v636
        %v638 = vpack.c.bf16 %v637, %v637
        %639 = vrot.lane.b32.xlu0 %v604, 64
        %v640 = vpop.permute.xlu0 %639
        %v642 = vsel %vm607, %v638, 0
        %vm644 = vcmask 1043456
        %v646 = vsel %vm644, %v640, 0
        %648 = vmatpush.bf16.msra.mxu0 0
        %649 = vmatpush.bf16.msra.mxu0 0
        %650 = vmatpush.bf16.msra.mxu0 0
        %651 = vmatpush.bf16.msra.mxu0 0
        %652 = vmatpush.bf16.msra.mxu0 0
        %653 = vmatpush.bf16.msra.mxu0 0
        %654 = vmatpush.bf16.msra.mxu0 0
        %655 = vmatpush.bf16.msra.mxu0 %v646
        %656 = vmatmul.bf16.gmra.mxu0 %v642
        %v657 = vpop.f32.mrf.mxu0
        %v658 = vadd.f32 0.0, %v657
        %v659 = vpop.f32.mrf.mxu0
        %660 = vdwg.mxu0
        %v661 = vpack.c.bf16 %v658, %v658
        %vm662 = vcmask 60416
        %663 = vst.msk [vmem:[#allocation2] sm:$0xf] %vm662, %v661
        %664 = vrot.lane.b32.xlu0 %v604, 120
        %v665 = vpop.permute.xlu0 %664
        %666 = vrot.lane.b32.xlu0 %v604, 88
        %v667 = vpop.permute.xlu0 %666
        %v669 = vsel %vm607, %v665, 0
        %v672 = vsel %vm607, %v667, 0
        %674 = vmatpush.bf16.xpose.msra.mxu0 0
        %675 = vmatpush.bf16.xpose.msra.mxu0 0
        %676 = vmatpush.bf16.xpose.msra.mxu0 0
        %677 = vmatpush.bf16.xpose.msra.mxu0 0
        %678 = vmatpush.bf16.xpose.msra.mxu0 0
        %679 = vmatpush.bf16.xpose.msra.mxu0 0
        %680 = vmatpush.bf16.xpose.msra.mxu0 0
        %681 = vmatpush.bf16.xpose.msra.mxu0 %v672
        %682 = vmatmul.bf16.gmra.mxu0 %v669
        %v683 = vpop.f32.mrf.mxu0
        %v684 = vadd.f32 0.0, %v683
        %v685 = vpop.f32.mrf.mxu0
        %686 = vdwg.mxu0
        %v687 = vsel %vm607, %v684, -inf
        %688 = vmax.xlane.f32.xlu0 %v687
        %v689 = vpop.xlane.xlu0 %688
        %v690 = vsub.f32 %v684, %v689
        %v691 = vmul.f32 %v690, 1.442695
        %v692 = vpow.pop %v691
        %v693 = vsel %vm607, %v692, 0.0
        %694 = vadd.xlane.f32.xlu0 %v693
        %v695 = vpop.xlane.xlu0 %694
        %v696 = vrcp.pop %v695
        %v697 = vmul.f32 %v692, %v696
        %v698 = vpack.c.bf16 %v697, %v697
        %699 = vrot.lane.b32.xlu0 %v604, 56
        %v700 = vpop.permute.xlu0 %699
        %v702 = vsel %vm607, %v698, 0
        %v705 = vsel %vm644, %v700, 0
        %707 = vmatpush.bf16.msra.mxu0 0
        %708 = vmatpush.bf16.msra.mxu0 0
        %709 = vmatpush.bf16.msra.mxu0 0
        %710 = vmatpush.bf16.msra.mxu0 0
        %711 = vmatpush.bf16.msra.mxu0 0
        %712 = vmatpush.bf16.msra.mxu0 0
        %713 = vmatpush.bf16.msra.mxu0 0
        %714 = vmatpush.bf16.msra.mxu0 %v705
        %715 = vmatmul.bf16.gmra.mxu0 %v702
        %v716 = vpop.f32.mrf.mxu0
        %v717 = vadd.f32 0.0, %v716
        %v718 = vpop.f32.mrf.mxu0
        %719 = vdwg.mxu0
        %v720 = vpack.c.bf16 %v717, %v717
        %722 = vrot.lane.b32.xlu0 %v720, 8
        %v723 = vpop.permute.xlu0 %722
        %vm725 = vcmask 126016
        %726 = vst.msk [vmem:[#allocation2] sm:$0xf] %vm725, %v723
        %727 = vrot.lane.b32.xlu0 %v604, 112
        %v728 = vpop.permute.xlu0 %727
        %729 = vrot.lane.b32.xlu0 %v604, 80
        %v730 = vpop.permute.xlu0 %729
        %v732 = vsel %vm607, %v728, 0
        %v735 = vsel %vm607, %v730, 0
        %737 = vmatpush.bf16.xpose.msra.mxu0 0
        %738 = vmatpush.bf16.xpose.msra.mxu0 0
        %739 = vmatpush.bf16.xpose.msra.mxu0 0
        %740 = vmatpush.bf16.xpose.msra.mxu0 0
        %741 = vmatpush.bf16.xpose.msra.mxu0 0
        %742 = vmatpush.bf16.xpose.msra.mxu0 0
        %743 = vmatpush.bf16.xpose.msra.mxu0 0
        %744 = vmatpush.bf16.xpose.msra.mxu0 %v735
        %745 = vmatmul.bf16.gmra.mxu0 %v732
        %v746 = vpop.f32.mrf.mxu0
        %v747 = vadd.f32 0.0, %v746
        %v748 = vpop.f32.mrf.mxu0
        %749 = vdwg.mxu0
        %v750 = vsel %vm607, %v747, -inf
        %751 = vmax.xlane.f32.xlu0 %v750
        %v752 = vpop.xlane.xlu0 %751
        %v753 = vsub.f32 %v747, %v752
        %v754 = vmul.f32 %v753, 1.442695
        %v755 = vpow.pop %v754
        %v756 = vsel %vm607, %v755, 0.0
        %757 = vadd.xlane.f32.xlu0 %v756
        %v758 = vpop.xlane.xlu0 %757
        %v759 = vrcp.pop %v758
        %v760 = vmul.f32 %v755, %v759
        %v761 = vpack.c.bf16 %v760, %v760
        %762 = vrot.lane.b32.xlu0 %v604, 48
        %v763 = vpop.permute.xlu0 %762
        %v765 = vsel %vm607, %v761, 0
        %v768 = vsel %vm644, %v763, 0
        %770 = vmatpush.bf16.msra.mxu0 0
        %771 = vmatpush.bf16.msra.mxu0 0
        %772 = vmatpush.bf16.msra.mxu0 0
        %773 = vmatpush.bf16.msra.mxu0 0
        %774 = vmatpush.bf16.msra.mxu0 0
        %775 = vmatpush.bf16.msra.mxu0 0
        %776 = vmatpush.bf16.msra.mxu0 0
        %777 = vmatpush.bf16.msra.mxu0 %v768
        %778 = vmatmul.bf16.gmra.mxu0 %v765
        %v779 = vpop.f32.mrf.mxu0
        %v780 = vadd.f32 0.0, %v779
        %v781 = vpop.f32.mrf.mxu0
        %782 = vdwg.mxu0
        %v783 = vpack.c.bf16 %v780, %v780
        %785 = vrot.lane.b32.xlu0 %v783, 16
        %v786 = vpop.permute.xlu0 %785
        %vm788 = vcmask 191616
        %789 = vst.msk [vmem:[#allocation2] sm:$0xf] %vm788, %v786
        %790 = vrot.lane.b32.xlu0 %v604, 104
        %v791 = vpop.permute.xlu0 %790
        %792 = vrot.lane.b32.xlu0 %v604, 72
        %v793 = vpop.permute.xlu0 %792
        %v795 = vsel %vm607, %v791, 0
        %v798 = vsel %vm607, %v793, 0
        %800 = vmatpush.bf16.xpose.msra.mxu0 0
        %801 = vmatpush.bf16.xpose.msra.mxu0 0
        %802 = vmatpush.bf16.xpose.msra.mxu0 0
        %803 = vmatpush.bf16.xpose.msra.mxu0 0
        %804 = vmatpush.bf16.xpose.msra.mxu0 0
        %805 = vmatpush.bf16.xpose.msra.mxu0 0
        %806 = vmatpush.bf16.xpose.msra.mxu0 0
        %807 = vmatpush.bf16.xpose.msra.mxu0 %v798
        %808 = vmatmul.bf16.gmra.mxu0 %v795
        %v809 = vpop.f32.mrf.mxu0
        %v810 = vadd.f32 0.0, %v809
        %v811 = vpop.f32.mrf.mxu0
        %812 = vdwg.mxu0
        %v813 = vsel %vm607, %v810, -inf
        %814 = vmax.xlane.f32.xlu0 %v813
        %v815 = vpop.xlane.xlu0 %814
        %v816 = vsub.f32 %v810, %v815
        %v817 = vmul.f32 %v816, 1.442695
        %v818 = vpow.pop %v817
        %v819 = vsel %vm607, %v818, 0.0
        %820 = vadd.xlane.f32.xlu0 %v819
        %v821 = vpop.xlane.xlu0 %820
        %v822 = vrcp.pop %v821
        %v823 = vmul.f32 %v818, %v822
        %v824 = vpack.c.bf16 %v823, %v823
        %825 = vrot.lane.b32.xlu0 %v604, 40
        %v826 = vpop.permute.xlu0 %825
        %v828 = vsel %vm607, %v824, 0
        %v831 = vsel %vm644, %v826, 0
        %833 = vmatpush.bf16.msra.mxu0 0
        %834 = vmatpush.bf16.msra.mxu0 0
        %835 = vmatpush.bf16.msra.mxu0 0
        %836 = vmatpush.bf16.msra.mxu0 0
        %837 = vmatpush.bf16.msra.mxu0 0
        %838 = vmatpush.bf16.msra.mxu0 0
        %839 = vmatpush.bf16.msra.mxu0 0
        %840 = vmatpush.bf16.msra.mxu0 %v831
        %841 = vmatmul.bf16.gmra.mxu0 %v828
        %v842 = vpop.f32.mrf.mxu0
        %v843 = vadd.f32 0.0, %v842
        %v844 = vpop.f32.mrf.mxu0
        %845 = vdwg.mxu0
        %v846 = vpack.c.bf16 %v843, %v843
        %848 = vrot.lane.b32.xlu0 %v846, 24
        %v849 = vpop.permute.xlu0 %848
        %vm851 = vcmask 257216
        %852 = vst.msk [vmem:[#allocation2] sm:$0xf] %vm851, %v849
        %v853 = vld [vmem:[#allocation2] sm:$0xf]
        %v854 = vld [vmem:[%s5] sm:$0xf]
        %v855 = vld [vmem:[%s5 + $0x4] sm:$0xf]
        %v856 = vld [vmem:[%s5 + $0x8] sm:$0xf]
        %v857 = vld [vmem:[%s5 + $0xc] sm:$0xf]
        %v858 = vld [vmem:[%s6] sm:$0x1]
        %v860 = vperm.slane %v858, 0
        %v866 = vunpack.c.l.b16 %v854
        %v867 = vunpack.c.l.b16 %v855
        %v868 = vunpack.c.l.b16 %v856
        %v869 = vunpack.c.l.b16 %v857
        %v870 = vpack.c.b16 %v867, %v866
        %v871 = vpack.c.b16 %v869, %v868
        %v875 = vsel %vm526, %v853, 0
        %877 = vmatpush.bf16.msra.mxu0 0
        %878 = vmatpush.bf16.msra.mxu0 0
        %879 = vmatpush.bf16.msra.mxu0 0
        %880 = vmatpush.bf16.msra.mxu0 0
        %881 = vmatpush.bf16.msra.mxu0 0
        %882 = vmatpush.bf16.msra.mxu0 0
        %883 = vmatpush.bf16.msra.mxu0 %v871
        %884 = vmatpush.bf16.msra.mxu0 %v870
        %885 = vmatmul.bf16.gmra.mxu0 %v875
        %v886 = vpop.f32.mrf.mxu0
        %v887 = vadd.f32 %v860, %v886
        %v888 = vpop.f32.mrf.mxu0
        %889 = vdwg.mxu0
        %v890 = vadd.f32 %v523, %v887
        %v891 = vld [vmem:[%s7] sm:$0x1]
        %v892 = vld [vmem:[%s8] sm:$0x1]
        %v893 = vsel %vm526, %v890, 0.0
        %894 = vadd.xlane.f32.xlu0 %v893
        %v895 = vpop.xlane.xlu0 %894
        %v896 = vmul.f32 %v895, %v536
        %v897 = vsub.f32 %v890, %v896
        %v898 = vmul.f32 %v897, %v897
        %v899 = vsel %vm526, %v898, 0.0
        %900 = vadd.xlane.f32.xlu0 %v899
        %v901 = vpop.xlane.xlu0 %900
        %v902 = vmul.f32 %v901, %v536
        %v903 = vadd.f32 %v902, 1e-06
        %v904 = vrsqrt.pop %v903
        %v905 = vmul.f32 %v904, %v903
        %v906 = vmul.f32 %v905, %v904
        %v907 = vmul.f32 0.5, %v906
        %v908 = vsub.f32 1.5, %v907
        %v909 = vmul.f32 %v904, %v908
        %vm910 = vweird.f32 %v903
        %vm911 = vweird.f32 %v904
        %vm912 = vmor %vm910, %vm911
        %v913 = vsel %vm912, %v904, %v909
        %v914 = vmul.f32 %v897, %v913
        %v916 = vperm.slane %v891, 0
        %v918 = vmul.f32 %v914, %v916
        %v920 = vperm.slane %v892, 0
        %v922 = vadd.f32 %v918, %v920
        %v923 = vpack.c.bf16 %v922, %v922
        %v924 = vld [vmem:[#allocation6] sm:$0xf]
        %v925 = vld [vmem:[#allocation6 + $0x4] sm:$0xf]
        %v926 = vld [vmem:[#allocation6 + $0x8] sm:$0xf]
        %v927 = vld [vmem:[#allocation6 + $0xc] sm:$0xf]
        %v928 = vld [vmem:[%s10] sm:$0x1]
        %v930 = vperm.slane %v928, 0
        %v936 = vunpack.c.l.b16 %v924
        %v937 = vunpack.c.l.b16 %v925
        %v938 = vunpack.c.l.b16 %v926
        %v939 = vunpack.c.l.b16 %v927
        %v940 = vpack.c.b16 %v937, %v936
        %v941 = vpack.c.b16 %v939, %v938
        %v945 = vsel %vm526, %v923, 0
        %947 = vmatpush.bf16.msra.mxu0 0
        %948 = vmatpush.bf16.msra.mxu0 0
        %949 = vmatpush.bf16.msra.mxu0 0
        %950 = vmatpush.bf16.msra.mxu0 0
        %951 = vmatpush.bf16.msra.mxu0 0
        %952 = vmatpush.bf16.msra.mxu0 0
        %953 = vmatpush.bf16.msra.mxu0 %v941
        %954 = vmatpush.bf16.msra.mxu0 %v940
        %955 = vmatmul.bf16.gmra.mxu0 %v945
        %v956 = vpop.f32.mrf.mxu0
        %v957 = vadd.f32 %v930, %v956
        %v958 = vpop.f32.mrf.mxu0
        %959 = vdwg.mxu0
        %v960 = vmul.f32 %v957, 0.5
        %v961 = vmul.f32 %v957, 0.70710677
        %v962 = vmul.f32 %v961, %v961
        %v963 = vmin.f32 16.0, %v962
        %v964 = vmul.f32 %v963, 2.1237322e-06
        %v965 = vadd.f32 %v964, 0.00028619796
        %v966 = vmul.f32 %v963, %v965
        %v967 = vadd.f32 %v966, 0.0036580483
        %v968 = vmul.f32 %v963, %v967
        %v969 = vadd.f32 %v968, 0.05243302
        %v970 = vmul.f32 %v963, %v969
        %v971 = vadd.f32 %v970, 0.18741608
        %v972 = vmul.f32 %v963, %v971
        %v973 = vadd.f32 %v972, 1.1283791
        %v974 = vmul.f32 %v961, %v973
        %v975 = vmul.f32 %v963, 3.8918573e-05
        %v976 = vadd.f32 %v975, 0.001143296
        %v977 = vmul.f32 %v963, %v976
        %v978 = vadd.f32 %v977, 0.014752088
        %v979 = vmul.f32 %v963, %v978
        %v980 = vadd.f32 %v979, 0.112945676
        %v981 = vmul.f32 %v963, %v980
        %v982 = vadd.f32 %v981, 0.4994258
        %v983 = vmul.f32 %v963, %v982
        %v984 = vadd.f32 %v983, 1.0
        %v985 = vrcp.pop %v984
        %v986 = vmul.f32 %v984, %v985
        %v987 = vsub.f32 1.0, %v986
        %v988 = vmul.f32 %v985, %v987
        %v989 = vadd.f32 %v985, %v988
        %vm990 = vweird.f32 %v984
        %vm991 = vweird.f32 %v985
        %vm992 = vmor %vm990, %vm991
        %v993 = vsel %vm992, %v985, %v989
        %v994 = vand.u32 2147483647, %v984
        %vm995 = vcmp.eq.f32.partialorder %v994, 8.507059e+37
        %v996 = vand.u32 %v984, 2147483648
        %v997 = vor.u32 1.1754944e-38, %v996
        %v998 = vsel %vm995, %v997, %v993
        %v999 = vmul.f32 %v974, %v998
        %v1000 = vmin.f32 %v999, 1.0
        %v1001 = vmax.f32 %v1000, -1.0
        %v1002 = vadd.f32 %v1001, 1.0
        %v1003 = vmul.f32 %v960, %v1002
        %v1004 = vpack.c.bf16 %v1003, %v1003
        %v1005 = vld [vmem:[%s11] sm:$0xf]
        %v1006 = vld [vmem:[%s11 + $0x4] sm:$0xf]
        %v1007 = vld [vmem:[%s11 + $0x8] sm:$0xf]
        %v1008 = vld [vmem:[%s11 + $0xc] sm:$0xf]
        %v1009 = vld [vmem:[%s11 + $0x10] sm:$0xf]
        %v1010 = vld [vmem:[%s11 + $0x14] sm:$0xf]
        %v1011 = vld [vmem:[%s11 + $0x18] sm:$0xf]
        %v1012 = vld [vmem:[%s11 + $0x1c] sm:$0xf]
        %v1013 = vld [vmem:[%s12] sm:$0x1]
        %v1015 = vperm.slane %v1013, 0
        %v1025 = vunpack.c.l.b16 %v1005
        %v1026 = vunpack.c.l.b16 %v1006
        %v1027 = vunpack.c.l.b16 %v1007
        %v1028 = vunpack.c.l.b16 %v1008
        %v1029 = vunpack.c.l.b16 %v1009
        %v1030 = vunpack.c.l.b16 %v1010
        %v1031 = vunpack.c.l.b16 %v1011
        %v1032 = vunpack.c.l.b16 %v1012
        %v1033 = vpack.c.b16 %v1026, %v1025
        %v1034 = vpack.c.b16 %v1028, %v1027
        %v1035 = vpack.c.b16 %v1030, %v1029
        %v1036 = vpack.c.b16 %v1032, %v1031
        %vm1041 = vcmask 523264
        %v1043 = vsel %vm1041, %v1004, 0
        %1045 = vmatpush.bf16.msra.mxu0 0
        %1046 = vmatpush.bf16.msra.mxu0 0
        %1047 = vmatpush.bf16.msra.mxu0 0
        %1048 = vmatpush.bf16.msra.mxu0 0
        %1049 = vmatpush.bf16.msra.mxu0 %v1036
        %1050 = vmatpush.bf16.msra.mxu0 %v1035
        %1051 = vmatpush.bf16.msra.mxu0 %v1034
        %1052 = vmatpush.bf16.msra.mxu0 %v1033
        %1053 = vmatmul.bf16.gmra.mxu0 %v1043
        %v1054 = vpop.f32.mrf.mxu0
        %v1055 = vadd.f32 %v1015, %v1054
        %v1056 = vpop.f32.mrf.mxu0
        %1057 = vdwg.mxu0
        %v1058 = vadd.f32 %v922, %v1055
        %v1059 = vld [vmem:[%s13] sm:$0x1]
        %v1060 = vld [vmem:[%s14] sm:$0x1]
        %v1061 = vsel %vm526, %v1058, 0.0
        %1062 = vadd.xlane.f32.xlu0 %v1061
        %v1063 = vpop.xlane.xlu0 %1062
        %v1064 = vmul.f32 %v1063, %v536
        %v1065 = vsub.f32 %v1058, %v1064
        %v1066 = vmul.f32 %v1065, %v1065
        %v1067 = vsel %vm526, %v1066, 0.0
        %1068 = vadd.xlane.f32.xlu0 %v1067
        %v1069 = vpop.xlane.xlu0 %1068
        %v1070 = vmul.f32 %v1069, %v536
        %v1071 = vadd.f32 %v1070, 1e-06
        %v1072 = vrsqrt.pop %v1071
        %v1073 = vmul.f32 %v1072, %v1071
        %v1074 = vmul.f32 %v1073, %v1072
        %v1075 = vmul.f32 0.5, %v1074
        %v1076 = vsub.f32 1.5, %v1075
        %v1077 = vmul.f32 %v1072, %v1076
        %vm1078 = vweird.f32 %v1071
        %vm1079 = vweird.f32 %v1072
        %vm1080 = vmor %vm1078, %vm1079
        %v1081 = vsel %vm1080, %v1072, %v1077
        %v1082 = vmul.f32 %v1065, %v1081
        %v1084 = vperm.slane %v1059, 0
        %v1086 = vmul.f32 %v1082, %v1084
        %v1088 = vperm.slane %v1060, 0
        %v1090 = vadd.f32 %v1086, %v1088
        %1091 = vst.msk [vmem:[%s517] sm:$0xff] %vm526, %v1090
        %s1092 = sand.u32 %s359, 1
        %s1093 = scalar_lea.sflag [#allocation5], %s1092
        %s1094 = sand.u32 %s359, 1
        %s1095 = smul.addr %s1094, 8
        %s1096 = scalar_lea.vmem [#allocation8], %s1095
        // Predicated region
        $region89: #{tpu_custom_call.1} parent=79 // pred_check
          %p1097 = pneg %p369
        $region90: #{tpu_custom_call.1} parent=79 // pred_check_branch
          %1099 = sbr.rel (%p1097) target = $region92
        $region91: #{tpu_custom_call.1} parent=79 // pred_region
          %1101 = vsyncadd %s1093, 0
          %s1102 = smul.addr %s31, 8
          %s1103 = scalar_lea.hbm %s15, %s1102
          %s1105 = sshll.u32 %s1096, 4
          %s1106 = int_to_ptr.vmem [resolvable:$true] %s1105
          %s1107 = sshll.u32 %s1103, 4
          %s1108 = int_to_ptr.hbm [resolvable:$true] %s1107
          %1110 = dma.vmem_to_hbm [thread:$0]  %s1106, 128, %s1108, %s1093
        $region92: #{tpu_custom_call.1} parent=79 // pred_fallthru
          _
      $region80: #{tpu_custom_call.1} parent=5 // pred_fallthru
        _
      %p1111 = scmp.le.s32.totalorder 2, %s26
      // Predicated region
      $region93: #{tpu_custom_call.1} parent=5 // pred_check
        %p1112 = pneg %p1111
      $region94: #{tpu_custom_call.1} parent=5 // pred_check_branch
        %1114 = sbr.rel (%p1112) target = $region96
      $region95: #{tpu_custom_call.1} parent=5 // pred_region
        %s1115 = ssub.s32 %s26, 2
        // Predicated region
        $region97: #{tpu_custom_call.1} parent=95 // pred_check
          %p1116 = pneg %p375
        $region98: #{tpu_custom_call.1} parent=95 // pred_check_branch
          %1118 = sbr.rel (%p1116) target = $region100
        $region99: #{tpu_custom_call.1} parent=95 // pred_region
          %s1119 = sand.u32 %s360, 1
          %s1120 = scalar_lea.sflag [#allocation5], %s1119
          %s1121 = sand.u32 %s360, 1
          %s1122 = smul.addr %s1121, 8
          %s1123 = scalar_lea.vmem [#allocation8], %s1122
          %1125 = dma.done %s1120, 128
        $region100: #{tpu_custom_call.1} parent=95 // pred_fallthru
          _
      $region96: #{tpu_custom_call.1} parent=5 // pred_fallthru
        _
    $region6: #{tpu_custom_call.1} parent=1 // loop_footer
      %s30 = sadd.s32 1, %s26
    $region7: #{tpu_custom_call.1} parent=1 // loop_footer_branch
      %25 = sbr.rel target = $region3
    $region8: #{tpu_custom_call.1} parent=1 // loop_exit
      _
    %1126 = vsyncpa [#allocation4], 1
    %s1127 = scalar_lea.sflag [#allocation4], 1
    %1128 = vsyncpa %s1127, 1
    %1129 = vsyncpa [#allocation7], 1
    %1130 = vsyncpa [#allocation5], 1
    %s1131 = scalar_lea.sflag [#allocation5], 1
    %1132 = vsyncpa %s1131, 1

</llo_original>
